<compile_context>
chip_gen: v5e
topology: v5e:2x2
jax: 0.10.0
libtpu: 0.0.40
codegen_flags: <defaults>
</compile_context>

<pallas_src>
import functools

import jax
import jax.numpy as jnp
from jax.experimental import pallas as pl
from jax.experimental.pallas import tpu as pltpu

FEAT_DIM = 256         # channel dim produced by BaseNet / consumed by attention
ATT_DIM = 256          # attention.att_dim
NUM_CLASSES = 5
CLASS_PAD = 128        # lane-dense padded class dim (output tile + padded V)
SCALE = ATT_DIM ** (-0.5)
SUBLANE_BF16 = 16      # bf16 sublane packing: T is padded to a multiple of this


def _ft_loss_kernel(x_ref, w_ref, v_ref, lw_ref, lb_ref, out_ref, *, t_real):
    """Attention pooling + Linear(256->5) for a block of Bb batch elements.

    x_ref  : (Bb, Tp, 256)  bf16  BaseNet output, pre-permuted to NTC, T padded
    w_ref  : (256, 256)     bf16  attention W
    v_ref  : (256, 128)     bf16  attention V * att_dim**-0.5, zero-padded lanes
    lw_ref : (256, 128)     f32   classifier weight^T, zero-padded to 128 lanes
    lb_ref : (1, 128)       f32   classifier bias, zero-padded
    out_ref: (Bb, 1, 128)   f32   padded logits (first 5 lanes are real classes)
    """
    x_bf = x_ref[...]                                     # (Bb, Tp, C) bf16
    bb, t_pad, c = x_bf.shape

    # Layout-free flatten (Tp is a multiple of the bf16 sublane tile, C = 256).
    x2 = x_bf.reshape(bb * t_pad, c)                      # (Bb*Tp, C) bf16

    # Main MXU matmul + tanh (f32 accumulate).
    h = jnp.tanh(jnp.dot(x2, w_ref[...],
                         preferred_element_type=jnp.float32))     # (Bb*Tp, A) f32

    # e = tanh(xW) @ (V*scale) on the MXU (V padded to 128 lanes; column 0 real).
    e_full = jnp.dot(h.astype(jnp.bfloat16), v_ref[...],
                     preferred_element_type=jnp.float32)          # (Bb*Tp, 128)
    e = e_full[:, :1].reshape(bb, t_pad, 1)                       # (Bb, Tp, 1)

    # Mask padded time steps out of the softmax (trace-time branch).
    if t_pad != t_real:
        tid = jax.lax.broadcasted_iota(jnp.int32, (1, t_pad, 1), 1)
        e = jnp.where(tid < t_real, e, -1e30)

    # Softmax over time (max-subtracted; identical to torch's exp/sum, safe).
    e_max = jnp.max(e, axis=1, keepdims=True)                     # (Bb, 1, 1)
    n1 = jnp.exp(e - e_max)
    alpha = n1 / jnp.sum(n1, axis=1, keepdims=True)               # (Bb, Tp, 1)

    # Weighted sum over time; bf16 x promoted to f32, accumulation in f32.
    pooled = jnp.sum(alpha * x_bf, axis=1)                        # (Bb, C) f32

    # Final Linear(256 -> 5), padded to 128 output lanes (f32 for precision).
    logits = jnp.dot(pooled, lw_ref[...],
                     preferred_element_type=jnp.float32) + lb_ref[...]  # (Bb, 128)
    out_ref[...] = logits.reshape(bb, 1, CLASS_PAD)


def _pick_block_b(B, t_pad):
    """Batch elements per grid step.

    Target ~4 MiB bf16 x tiles (amortizes the ~0.35us/step pipeline overhead;
    2x double-buffered tiles stay well under v5e's 16 MiB default scoped VMEM
    once vmem_limit_bytes is raised), but keep at least 2 grid steps so the
    "parallel" axis can shard across v7x's two TensorCores.
    """
    tile_target_bytes = 4 * 1024 * 1024
    bytes_per_b = t_pad * FEAT_DIM * 2                    # bf16
    bb = max(1, tile_target_bytes // bytes_per_b)
    if B >= 2:
        bb = min(bb, (B + 1) // 2)                        # >= 2 grid steps
    return int(min(bb, B))


def ft_loss_forward(x, W, V, lin_w, lin_b, block_b=None):
    """x: (B, 256, T) BaseNet output in torch NCT layout (any float dtype)."""
    B, C, T = x.shape
    assert C == FEAT_DIM

    # --- one-time wrapper-side layout work (XLA, outside the hot loop) ---
    # NCT -> NTC once in HBM, cast to bf16, pad T to the bf16 sublane tile.
    t_pad = -(-T // SUBLANE_BF16) * SUBLANE_BF16
    x_ntc = jnp.transpose(x, (0, 2, 1)).astype(jnp.bfloat16)       # (B, T, C)
    if t_pad != T:
        x_ntc = jnp.pad(x_ntc, ((0, 0), (0, t_pad - T), (0, 0)))

    bb = _pick_block_b(B, t_pad) if block_b is None else block_b
    b_pad = -(-B // bb) * bb
    if b_pad != B:                                        # pad batch (sliced off)
        x_ntc = jnp.pad(x_ntc, ((0, b_pad - B), (0, 0), (0, 0)))
    grid = b_pad // bb

    # Parameter packing (folds to constants under jit). Scale folded into V,
    # V/W pre-cast to bf16 (MXU operands), classifier packed lane-dense.
    w_bf16 = W.astype(jnp.bfloat16)                                     # (256, 256)
    v_pad = jnp.zeros((ATT_DIM, CLASS_PAD), jnp.bfloat16)
    v_pad = v_pad.at[:, :1].set((V.astype(jnp.float32) * SCALE).astype(jnp.bfloat16))
    lw_pad = jnp.zeros((FEAT_DIM, CLASS_PAD), jnp.float32)
    lw_pad = lw_pad.at[:, :NUM_CLASSES].set(lin_w.T.astype(jnp.float32))
    lb_pad = jnp.zeros((1, CLASS_PAD), jnp.float32)
    lb_pad = lb_pad.at[:, :NUM_CLASSES].set(lin_b.astype(jnp.float32)[None, :])

    flops = (2 * b_pad * t_pad * FEAT_DIM * ATT_DIM        # x @ W
             + 2 * b_pad * t_pad * ATT_DIM * CLASS_PAD     # h @ V (padded)
             + 2 * b_pad * FEAT_DIM * CLASS_PAD)           # classifier
    transcendentals = b_pad * t_pad * ATT_DIM + b_pad * t_pad   # tanh + exp
    bytes_accessed = (x_ntc.size * 2 + w_bf16.size * 2 + v_pad.size * 2
                      + lw_pad.size * 4 + lb_pad.size * 4
                      + b_pad * CLASS_PAD * 4)

    kernel = functools.partial(_ft_loss_kernel, t_real=T)

    out = pl.pallas_call(
        kernel,
        out_shape=jax.ShapeDtypeStruct((b_pad, 1, CLASS_PAD), jnp.float32),
        grid_spec=pltpu.PrefetchScalarGridSpec(
            num_scalar_prefetch=0,
            grid=(grid,),
            in_specs=[
                pl.BlockSpec((bb, t_pad, FEAT_DIM), lambda b: (b, 0, 0)),   # NTC tile
                pl.BlockSpec((FEAT_DIM, ATT_DIM), lambda b: (0, 0)),
                pl.BlockSpec((ATT_DIM, CLASS_PAD), lambda b: (0, 0)),
                pl.BlockSpec((FEAT_DIM, CLASS_PAD), lambda b: (0, 0)),
                pl.BlockSpec((1, CLASS_PAD), lambda b: (0, 0)),
            ],
            out_specs=pl.BlockSpec((bb, 1, CLASS_PAD), lambda b: (b, 0, 0)),
        ),
        compiler_params=pltpu.CompilerParams(
            dimension_semantics=("parallel",),
            vmem_limit_bytes=48 * 1024 * 1024),
        cost_estimate=pl.CostEstimate(
            flops=flops,
            transcendentals=transcendentals,
            bytes_accessed=bytes_accessed),
    )(x_ntc, w_bf16, v_pad, lw_pad, lb_pad)

    return out[:B, 0, :NUM_CLASSES]                                      # (B, 5)


def ft_loss_reference(x, W, V, lin_w, lin_b):
    """Pure-JAX f32 re-implementation of the torch forward, for verification."""
    xt = jnp.transpose(x, (0, 2, 1))                                    # (B, T, C)
    e = jnp.einsum("btc,ca->bta", xt, W)
    e = jnp.einsum("bta,ao->bto", jnp.tanh(e), V) * SCALE               # (B, T, 1)
    n1 = jnp.exp(e)
    n2 = jnp.sum(jnp.exp(e), axis=1, keepdims=True)
    alpha = n1 / n2
    pooled = jnp.sum(alpha * xt, axis=1)                                # (B, C)
    return pooled @ lin_w.T + lin_b                                     # (B, 5)


if __name__ == "__main__":
    key = jax.random.PRNGKey(0)
    k_x, k_w, k_v, k_lw, k_lb = jax.random.split(key, 5)

    B, T = 16, 8
    # BaseNet output stand-in: (B, 256, T), torch NCT layout.
    x = jax.random.normal(k_x, (B, FEAT_DIM, T), dtype=jnp.float32)

    # Deterministic parameters (shapes from the module __init__). Moderate
    # scales keep the bf16-MXU kernel within a tight band of the f32 reference
    # (real weights come from a trained checkpoint anyway).
    W = jax.random.normal(k_w, (FEAT_DIM, ATT_DIM), dtype=jnp.float32) * 0.0625
    V = jax.random.normal(k_v, (ATT_DIM, 1), dtype=jnp.float32)
    lin_w = jax.random.normal(k_lw, (NUM_CLASSES, FEAT_DIM), dtype=jnp.float32) * 0.05
    lin_b = jax.random.normal(k_lb, (NUM_CLASSES,), dtype=jnp.float32) * 0.05

    out = ft_loss_forward(x, W, V, lin_w, lin_b)     # bb=8 -> grid of 2 steps
    out = jax.block_until_ready(out)

    ref = ft_loss_reference(x, W, V, lin_w, lin_b)
    assert out.shape == (B, NUM_CLASSES)
    # Relaxed tolerance: bf16 x / W / V MXU operands (f32 accumulate) drift
    # slightly from the pure-f32 reference; structural bugs would show O(0.1+).
    assert jnp.allclose(out, ref, atol=5e-2, rtol=5e-2), (out, ref)

    print("KERNEL_OK")
</pallas_src>

<mosaic_0001>
module attributes {stable_mosaic.version = 11 : i64} {
  func.func @_ft_loss_kernel(%arg0: i32, %arg1: memref<8x16x256xbf16, #tpu.memory_space<vmem>>, %arg2: memref<256x256xbf16, #tpu.memory_space<vmem>>, %arg3: memref<256x128xbf16, #tpu.memory_space<vmem>>, %arg4: memref<256x128xf32, #tpu.memory_space<vmem>>, %arg5: memref<1x128xf32, #tpu.memory_space<vmem>>, %arg6: memref<8x1x128xf32, #tpu.memory_space<vmem>>) attributes {dimension_semantics = [#tpu.dimension_semantics<parallel>], iteration_bounds = array<i64: 2>, scalar_prefetch = 0 : i64, scratch_operands = 0 : i64, tpu.core_type = #tpu.core_type<tc>, window_params = [{transform_indices = @transform_0, window_bounds = array<i64: 8, 16, 256>}, {pipeline_mode = #tpu.pipeline_mode<synchronous>, transform_indices = @transform_1, window_bounds = array<i64: 256, 256>}, {pipeline_mode = #tpu.pipeline_mode<synchronous>, transform_indices = @transform_2, window_bounds = array<i64: 256, 128>}, {pipeline_mode = #tpu.pipeline_mode<synchronous>, transform_indices = @transform_3, window_bounds = array<i64: 256, 128>}, {pipeline_mode = #tpu.pipeline_mode<synchronous>, transform_indices = @transform_4, window_bounds = array<i64: 1, 128>}, {transform_indices = @transform_5, window_bounds = array<i64: 8, 1, 128>}]} {
    %c0 = arith.constant 0 : index
    %c0_0 = arith.constant 0 : index
    %c0_1 = arith.constant 0 : index
    %0 = vector.load %arg1[%c0, %c0_0, %c0_1] : memref<8x16x256xbf16, #tpu.memory_space<vmem>>, vector<8x16x256xbf16>
    %1 = vector.shape_cast %0 : vector<8x16x256xbf16> to vector<128x256xbf16>
    %c0_2 = arith.constant 0 : index
    %c0_3 = arith.constant 0 : index
    %2 = vector.load %arg2[%c0_2, %c0_3] : memref<256x256xbf16, #tpu.memory_space<vmem>>, vector<256x256xbf16>
    %cst = arith.constant dense<0.000000e+00> : vector<128x256xf32>
    %3 = tpu.matmul %1, %2, %cst {dimension_numbers = #tpu.dot_dimension_numbers<[1], [0], [0], [1], [0, 0, 1, 1], [], []>} : vector<128x256xbf16>, vector<256x256xbf16>, vector<128x256xf32> -> vector<128x256xf32>
    %4 = math.tanh %3 : vector<128x256xf32>
    %5 = arith.truncf %4 : vector<128x256xf32> to vector<128x256xbf16>
    %c0_4 = arith.constant 0 : index
    %c0_5 = arith.constant 0 : index
    %6 = vector.load %arg3[%c0_4, %c0_5] : memref<256x128xbf16, #tpu.memory_space<vmem>>, vector<256x128xbf16>
    %cst_6 = arith.constant dense<0.000000e+00> : vector<128x128xf32>
    %7 = tpu.matmul %5, %6, %cst_6 {dimension_numbers = #tpu.dot_dimension_numbers<[1], [0], [0], [1], [0, 0, 1, 1], [], []>} : vector<128x256xbf16>, vector<256x128xbf16>, vector<128x128xf32> -> vector<128x128xf32>
    %8 = vector.extract_strided_slice %7 {offsets = [0, 0], sizes = [128, 1], strides = [1, 1]} : vector<128x128xf32> to vector<128x1xf32>
    %9 = vector.shape_cast %8 : vector<128x1xf32> to vector<8x16x1xf32>
    %10 = tpu.iota {dimensions = array<i32: 1>} : vector<1x16x1xi32>
    %c8_i32 = arith.constant 8 : i32
    %11 = vector.broadcast %c8_i32 : i32 to vector<1x16x1xi32>
    %12 = arith.cmpi slt, %10, %11 : vector<1x16x1xi32>
    %cst_7 = arith.constant -1.000000e+30 : f32
    %13 = vector.shape_cast %12 : vector<1x16x1xi1> to vector<1x16x1xi1>
    %14 = vector.broadcast %13 : vector<1x16x1xi1> to vector<8x16x1xi1>
    %15 = vector.broadcast %cst_7 : f32 to vector<8x16x1xf32>
    %16 = arith.select %14, %9, %15 : vector<8x16x1xi1>, vector<8x16x1xf32>
    %cst_8 = arith.constant dense<0xFF800000> : vector<8x1xf32>
    %17 = vector.multi_reduction <maximumf>, %16, %cst_8 [1] : vector<8x16x1xf32> to vector<8x1xf32>
    %18 = vector.shape_cast %17 : vector<8x1xf32> to vector<8x1x1xf32>
    %19 = vector.broadcast %18 : vector<8x1x1xf32> to vector<8x16x1xf32>
    %20 = arith.subf %16, %19 : vector<8x16x1xf32>
    %21 = math.exp %20 : vector<8x16x1xf32>
    %cst_9 = arith.constant dense<0.000000e+00> : vector<8x1xf32>
    %22 = vector.multi_reduction <add>, %21, %cst_9 [1] : vector<8x16x1xf32> to vector<8x1xf32>
    %23 = vector.shape_cast %22 : vector<8x1xf32> to vector<8x1x1xf32>
    %24 = vector.broadcast %23 : vector<8x1x1xf32> to vector<8x16x1xf32>
    %25 = arith.divf %21, %24 : vector<8x16x1xf32>
    %26 = arith.extf %0 : vector<8x16x256xbf16> to vector<8x16x256xf32>
    %27 = vector.broadcast %25 : vector<8x16x1xf32> to vector<8x16x256xf32>
    %28 = arith.mulf %27, %26 : vector<8x16x256xf32>
    %cst_10 = arith.constant dense<0.000000e+00> : vector<8x256xf32>
    %29 = vector.multi_reduction <add>, %28, %cst_10 [1] : vector<8x16x256xf32> to vector<8x256xf32>
    %c0_11 = arith.constant 0 : index
    %c0_12 = arith.constant 0 : index
    %30 = vector.load %arg4[%c0_11, %c0_12] : memref<256x128xf32, #tpu.memory_space<vmem>>, vector<256x128xf32>
    %cst_13 = arith.constant dense<0.000000e+00> : vector<8x128xf32>
    %31 = tpu.matmul %29, %30, %cst_13 {dimension_numbers = #tpu.dot_dimension_numbers<[1], [0], [0], [1], [0, 0, 1, 1], [], []>} : vector<8x256xf32>, vector<256x128xf32>, vector<8x128xf32> -> vector<8x128xf32>
    %c0_14 = arith.constant 0 : index
    %c0_15 = arith.constant 0 : index
    %32 = vector.load %arg5[%c0_14, %c0_15] : memref<1x128xf32, #tpu.memory_space<vmem>>, vector<1x128xf32>
    %33 = vector.broadcast %32 : vector<1x128xf32> to vector<8x128xf32>
    %34 = arith.addf %31, %33 : vector<8x128xf32>
    %35 = vector.shape_cast %34 : vector<8x128xf32> to vector<8x1x128xf32>
    %c0_16 = arith.constant 0 : index
    %c0_17 = arith.constant 0 : index
    %c0_18 = arith.constant 0 : index
    %36 = vector.load %arg6[%c0_16, %c0_17, %c0_18] : memref<8x1x128xf32, #tpu.memory_space<vmem>>, vector<8x1x128xf32>
    tpu.vector_store %arg6[%c0_16, %c0_17, %c0_18], %35 {strides = array<i32>} : memref<8x1x128xf32, #tpu.memory_space<vmem>>, vector<8x1x128xf32>,
    return
  }
  func.func @transform_0(%arg0: i32) -> (i32, i32, i32) {
    %c0_i32 = arith.constant 0 : i32
    %c0_i32_0 = arith.constant 0 : i32
    %c0_i32_1 = arith.constant 0 : i32
    return %arg0, %c0_i32, %c0_i32_0 : i32, i32, i32
  }
  func.func @transform_1(%arg0: i32) -> (i32, i32) {
    %c0_i32 = arith.constant 0 : i32
    %c0_i32_0 = arith.constant 0 : i32
    %c0_i32_1 = arith.constant 0 : i32
    return %c0_i32, %c0_i32_0 : i32, i32
  }
  func.func @transform_2(%arg0: i32) -> (i32, i32) {
    %c0_i32 = arith.constant 0 : i32
    %c0_i32_0 = arith.constant 0 : i32
    %c0_i32_1 = arith.constant 0 : i32
    return %c0_i32, %c0_i32_0 : i32, i32
  }
  func.func @transform_3(%arg0: i32) -> (i32, i32) {
    %c0_i32 = arith.constant 0 : i32
    %c0_i32_0 = arith.constant 0 : i32
    %c0_i32_1 = arith.constant 0 : i32
    return %c0_i32, %c0_i32_0 : i32, i32
  }
  func.func @transform_4(%arg0: i32) -> (i32, i32) {
    %c0_i32 = arith.constant 0 : i32
    %c0_i32_0 = arith.constant 0 : i32
    %c0_i32_1 = arith.constant 0 : i32
    return %c0_i32, %c0_i32_0 : i32, i32
  }
  func.func @transform_5(%arg0: i32) -> (i32, i32, i32) {
    %c0_i32 = arith.constant 0 : i32
    %c0_i32_0 = arith.constant 0 : i32
    %c0_i32_1 = arith.constant 0 : i32
    return %arg0, %c0_i32, %c0_i32_0 : i32, i32, i32
  }
}

</mosaic_0001>

<llo_original>
// kernel: tpu_custom_call.1
$region0: #{tpu_custom_call.1}
  #allocation0 [shape = 'u32[]', space=smem, size = 0x4, offset = 0x4, fixed_abs, tag = 'smem constant byte address 0x4 - core index']
  #allocation1 [shape = 'u32[72,128]{1,0:T(1,128)}', space=vmem, size = 0x9000, scoped, tag = 'internal scratch']
  %s0 = inlined_call_operand.hbm [shape: bf16[16,16,256], index: 0, kind: input, shape index: {}]
  %s1 = inlined_call_operand.hbm [shape: bf16[256,256], index: 1, kind: input, shape index: {}]
  %s2 = inlined_call_operand.hbm [shape: bf16[256,128], index: 2, kind: input, shape index: {}]
  %s3 = inlined_call_operand.hbm [shape: f32[256,128], index: 3, kind: input, shape index: {}]
  %s4 = inlined_call_operand.vmem [shape: f32[1,128], index: 4, kind: input, shape index: {}]
  %s5 = inlined_call_operand.hbm [shape: f32[16,1,128], index: 5, kind: output, shape index: {}]
  %s6 = sld [smem:[#allocation0]]
  $region69: #{tpu_custom_call.1} parent=0
    _
  %s8 = ssub.s32 1, %s6
  %s9 = scalar_select 0, %s8, %s6
  $region1: #{tpu_custom_call.1} parent=0
    #allocation2 [shape = 'u8[131072]{0}', space=vmem, size = 0x20000, scoped, tag = 'input window, operand 0']
    #allocation3 [shape = 's32[2]{0}', space=sflag, size = 0x8, scoped, tag = 'scoped memory for tpu_custom_call.1']
    #allocation4 [shape = 's32[2]{0}', space=sflag, size = 0x8, scoped, tag = 'scoped memory for tpu_custom_call.1']
    #allocation5 [shape = 'u8[131072]{0}', space=vmem, size = 0x20000, scoped, tag = 'input window, operand 1, single buffered']
    #allocation6 [shape = 's32[1]{0}', space=sflag, size = 0x4, scoped, tag = 'scoped memory for tpu_custom_call.1']
    #allocation7 [shape = 'u8[65536]{0}', space=vmem, size = 0x10000, scoped, tag = 'input window, operand 2, single buffered']
    #allocation8 [shape = 'u8[131072]{0}', space=vmem, size = 0x20000, scoped, tag = 'input window, operand 3, single buffered']
    #allocation9 [shape = 's32[1]{0}', space=sflag, size = 0x4, scoped, tag = 'scoped memory for tpu_custom_call.1']
    #allocation10 [shape = 'u8[8192]{0}', space=vmem, size = 0x2000, scoped, tag = 'output window, operand 0']
    %10 = vsyncpa [#allocation3], 0
    %s11 = scalar_lea.sflag [#allocation3], 1
    %12 = vsyncpa %s11, 0
    %13 = vsyncpa [#allocation6], 0
    %14 = vsyncpa [#allocation9], 0
    %15 = vsyncpa [#allocation4], 0
    %s16 = scalar_lea.sflag [#allocation4], 1
    %17 = vsyncpa %s16, 0
    loop: start=0, step=1, limit=4
    $region2: #{tpu_custom_call.1} parent=1 // loop_pre_header
      _
    $region3: #{tpu_custom_call.1} parent=1 // loop_header
      %s19 = sphi 0, %s23
      %p20 = scmp.ge.s32.totalorder %s19, 4
      %s29 = sphi 0, %s31
      %s32 = sphi 0, %s29
      %s33 = sphi 0, %s32
      %s49 = sphi 0, %s33
      %s53 = sphi 0, %s53
      %s55 = sphi 0, %s53
      %s56 = sphi 0, %s55
      %s70 = sphi 0, %s56
      %s74 = sphi 0, %s74
      %s76 = sphi 0, %s74
      %s77 = sphi 0, %s76
      %s91 = sphi 0, %s77
      %s95 = sphi 0, %s95
      %s97 = sphi 0, %s95
      %s98 = sphi 0, %s97
      %s112 = sphi 0, %s98
      %s116 = sphi 0, %s116
      %s118 = sphi 0, %s116
      %s119 = sphi 0, %s118
      %s133 = sphi 0, %s119
      %s139 = sphi 0, %s141
      %s142 = sphi 0, %s139
      %s143 = sphi 0, %s142
      %s159 = sphi 0, %s143
    $region4: #{tpu_custom_call.1} parent=1 // loop_header_branch
      %22 = sbr.rel (%p20) target = $region8
    $region5: #{tpu_custom_call.1} parent=1 // loop_body
      %s24 = ssub.s32 %s19, 1
      %s25 = ssub.s32 %s19, 2
      %s26 = sadd.s32 %s19, 1
      %s27 = ssub.s32 %s19, %s26
      %p28 = scmp.eq.s32.totalorder %s27, 0
      %s30 = sadd.s32 %s29, 1
      %s31 = scalar_select %p28, %s29, %s30
      %p34 = pneg %p28
      %p35 = scmp.eq.s32.totalorder %s19, 1
      %p36 = por %p34, %p35
      %p37 = scmp.ne.s32.totalorder %s29, %s32
      %p38 = scmp.eq.s32.totalorder %s19, 0
      %p39 = por %p37, %p38
      %p40 = scmp.ne.s32.totalorder %s29, %s32
      %p41 = scmp.eq.s32.totalorder %s24, 1
      %p42 = por %p40, %p41
      %p43 = scmp.ne.s32.totalorder %s32, %s33
      %p44 = scmp.eq.s32.totalorder %s24, 0
      %p45 = por %p43, %p44
      %p46 = scmp.ne.s32.totalorder %s32, %s33
      %p47 = scmp.eq.s32.totalorder %s25, 1
      %p48 = por %p46, %p47
      %p50 = scmp.ne.s32.totalorder %s33, %s49
      %p51 = scmp.eq.s32.totalorder %s25, 0
      %p52 = por %p50, %p51
      %s54 = sadd.s32 %s53, 1
      %p57 = scmp.eq.s32.totalorder %s19, 1
      %p58 = scmp.ne.s32.totalorder %s53, %s55
      %p59 = scmp.eq.s32.totalorder %s19, 0
      %p60 = por %p58, %p59
      %p61 = scmp.ne.s32.totalorder %s53, %s55
      %p62 = scmp.eq.s32.totalorder %s24, 1
      %p63 = por %p61, %p62
      %p64 = scmp.ne.s32.totalorder %s55, %s56
      %p65 = scmp.eq.s32.totalorder %s24, 0
      %p66 = por %p64, %p65
      %p67 = scmp.ne.s32.totalorder %s55, %s56
      %p68 = scmp.eq.s32.totalorder %s25, 1
      %p69 = por %p67, %p68
      %p71 = scmp.ne.s32.totalorder %s56, %s70
      %p72 = scmp.eq.s32.totalorder %s25, 0
      %p73 = por %p71, %p72
      %s75 = sadd.s32 %s74, 1
      %p78 = scmp.eq.s32.totalorder %s19, 1
      %p79 = scmp.ne.s32.totalorder %s74, %s76
      %p80 = scmp.eq.s32.totalorder %s19, 0
      %p81 = por %p79, %p80
      %p82 = scmp.ne.s32.totalorder %s74, %s76
      %p83 = scmp.eq.s32.totalorder %s24, 1
      %p84 = por %p82, %p83
      %p85 = scmp.ne.s32.totalorder %s76, %s77
      %p86 = scmp.eq.s32.totalorder %s24, 0
      %p87 = por %p85, %p86
      %p88 = scmp.ne.s32.totalorder %s76, %s77
      %p89 = scmp.eq.s32.totalorder %s25, 1
      %p90 = por %p88, %p89
      %p92 = scmp.ne.s32.totalorder %s77, %s91
      %p93 = scmp.eq.s32.totalorder %s25, 0
      %p94 = por %p92, %p93
      %s96 = sadd.s32 %s95, 1
      %p99 = scmp.eq.s32.totalorder %s19, 1
      %p100 = scmp.ne.s32.totalorder %s95, %s97
      %p101 = scmp.eq.s32.totalorder %s19, 0
      %p102 = por %p100, %p101
      %p103 = scmp.ne.s32.totalorder %s95, %s97
      %p104 = scmp.eq.s32.totalorder %s24, 1
      %p105 = por %p103, %p104
      %p106 = scmp.ne.s32.totalorder %s97, %s98
      %p107 = scmp.eq.s32.totalorder %s24, 0
      %p108 = por %p106, %p107
      %p109 = scmp.ne.s32.totalorder %s97, %s98
      %p110 = scmp.eq.s32.totalorder %s25, 1
      %p111 = por %p109, %p110
      %p113 = scmp.ne.s32.totalorder %s98, %s112
      %p114 = scmp.eq.s32.totalorder %s25, 0
      %p115 = por %p113, %p114
      %s117 = sadd.s32 %s116, 1
      %p120 = scmp.eq.s32.totalorder %s19, 1
      %p121 = scmp.ne.s32.totalorder %s116, %s118
      %p122 = scmp.eq.s32.totalorder %s19, 0
      %p123 = por %p121, %p122
      %p124 = scmp.ne.s32.totalorder %s116, %s118
      %p125 = scmp.eq.s32.totalorder %s24, 1
      %p126 = por %p124, %p125
      %p127 = scmp.ne.s32.totalorder %s118, %s119
      %p128 = scmp.eq.s32.totalorder %s24, 0
      %p129 = por %p127, %p128
      %p130 = scmp.ne.s32.totalorder %s118, %s119
      %p131 = scmp.eq.s32.totalorder %s25, 1
      %p132 = por %p130, %p131
      %p134 = scmp.ne.s32.totalorder %s119, %s133
      %p135 = scmp.eq.s32.totalorder %s25, 0
      %p136 = por %p134, %p135
      %s137 = ssub.s32 %s19, %s26
      %p138 = scmp.eq.s32.totalorder %s137, 0
      %s140 = sadd.s32 %s139, 1
      %s141 = scalar_select %p138, %s139, %s140
      %p144 = pneg %p138
      %p145 = scmp.eq.s32.totalorder %s19, 1
      %p146 = por %p144, %p145
      %p147 = scmp.ne.s32.totalorder %s139, %s142
      %p148 = scmp.eq.s32.totalorder %s19, 0
      %p149 = por %p147, %p148
      %p150 = scmp.ne.s32.totalorder %s139, %s142
      %p151 = scmp.eq.s32.totalorder %s24, 1
      %p152 = por %p150, %p151
      %p153 = scmp.ne.s32.totalorder %s142, %s143
      %p154 = scmp.eq.s32.totalorder %s24, 0
      %p155 = por %p153, %p154
      %p156 = scmp.ne.s32.totalorder %s142, %s143
      %p157 = scmp.eq.s32.totalorder %s25, 1
      %p158 = por %p156, %p157
      %p160 = scmp.ne.s32.totalorder %s143, %s159
      %p161 = scmp.eq.s32.totalorder %s25, 0
      %p162 = por %p160, %p161
      %p163 = scmp.le.s32.totalorder 1, %s19
      %p164 = scmp.lt.s32.totalorder %s19, 3
      %p165 = pnand %p163, %p164
      %p166 = pneg %p165
      // Predicated region
      $region9: #{tpu_custom_call.1} parent=5 // pred_check
        _
      $region10: #{tpu_custom_call.1} parent=5 // pred_check_branch
        %168 = sbr.rel (%p165) target = $region12
      $region11: #{tpu_custom_call.1} parent=5 // pred_region
        %s169 = ssub.s32 %s19, 1
        // Predicated region
        $region13: #{tpu_custom_call.1} parent=11 // pred_check
          %p170 = pneg %p66
        $region14: #{tpu_custom_call.1} parent=11 // pred_check_branch
          %172 = sbr.rel (%p170) target = $region16
        $region15: #{tpu_custom_call.1} parent=11 // pred_region
          %174 = vsyncadd [#allocation6], 0
          %s175 = sshll.u32 %s1, 4
          %s176 = int_to_ptr.hbm [resolvable:$true] %s175
          %s177 = sshll.u32 [#allocation5], 4
          %s178 = int_to_ptr.vmem [resolvable:$true] %s177
          %183 = dma.hbm_to_vmem [thread:$0]  %s176, 4096, %s178, [#allocation6], 128, 128, 8
        $region16: #{tpu_custom_call.1} parent=11 // pred_fallthru
          _
        // Predicated region
        $region17: #{tpu_custom_call.1} parent=11 // pred_check
          %p184 = pneg %p87
        $region18: #{tpu_custom_call.1} parent=11 // pred_check_branch
          %186 = sbr.rel (%p184) target = $region20
        $region19: #{tpu_custom_call.1} parent=11 // pred_region
          %188 = vsyncadd [#allocation6], 0
          %s189 = sshll.u32 %s2, 4
          %s190 = int_to_ptr.hbm [resolvable:$true] %s189
          %s191 = sshll.u32 [#allocation7], 4
          %s192 = int_to_ptr.vmem [resolvable:$true] %s191
          %197 = dma.hbm_to_vmem [thread:$0]  %s190, 2048, %s192, [#allocation6], 64, 64, 4
        $region20: #{tpu_custom_call.1} parent=11 // pred_fallthru
          _
        // Predicated region
        $region21: #{tpu_custom_call.1} parent=11 // pred_check
          %p198 = pneg %p108
        $region22: #{tpu_custom_call.1} parent=11 // pred_check_branch
          %200 = sbr.rel (%p198) target = $region24
        $region23: #{tpu_custom_call.1} parent=11 // pred_region
          %202 = vsyncadd [#allocation9], 0
          %s203 = sshll.u32 %s3, 4
          %s204 = int_to_ptr.hbm [resolvable:$true] %s203
          %s205 = sshll.u32 [#allocation8], 4
          %s206 = int_to_ptr.vmem [resolvable:$true] %s205
          %211 = dma.hbm_to_vmem [thread:$0]  %s204, 4096, %s206, [#allocation9], 128, 128, 8
        $region24: #{tpu_custom_call.1} parent=11 // pred_fallthru
          _
        // Predicated region
        $region25: #{tpu_custom_call.1} parent=11 // pred_check
          %p212 = pneg %p129
        $region26: #{tpu_custom_call.1} parent=11 // pred_check_branch
          %214 = sbr.rel (%p212) target = $region28
        $region27: #{tpu_custom_call.1} parent=11 // pred_region
          _
        $region28: #{tpu_custom_call.1} parent=11 // pred_fallthru
          _
      $region12: #{tpu_custom_call.1} parent=5 // pred_fallthru
        _
      %p215 = scmp.lt.s32.totalorder %s19, 2
      // Predicated region
      $region29: #{tpu_custom_call.1} parent=5 // pred_check
        %p216 = pneg %p215
      $region30: #{tpu_custom_call.1} parent=5 // pred_check_branch
        %218 = sbr.rel (%p216) target = $region32
      $region31: #{tpu_custom_call.1} parent=5 // pred_region
        // Predicated region
        $region33: #{tpu_custom_call.1} parent=31 // pred_check
          %p219 = pneg %p39
        $region34: #{tpu_custom_call.1} parent=31 // pred_check_branch
          %221 = sbr.rel (%p219) target = $region36
        $region35: #{tpu_custom_call.1} parent=31 // pred_region
          %s222 = sand.u32 %s29, 1
          %s223 = scalar_lea.sflag [#allocation3], %s222
          %s224 = sand.u32 %s29, 1
          %s225 = smul.addr %s224, 128
          %s226 = scalar_lea.vmem [#allocation2], %s225
          %s227 = smul.u32 8, %s19
          %229 = vsyncadd %s223, 0
          %s230 = smul.addr %s227, 4
          %s231 = smul.addr %s230, 4
          %s232 = scalar_lea.hbm %s0, %s231
          %s233 = sshll.u32 %s232, 4
          %s234 = int_to_ptr.hbm [resolvable:$true] %s233
          %s235 = sshll.u32 %s226, 4
          %s236 = int_to_ptr.vmem [resolvable:$true] %s235
          %241 = dma.hbm_to_vmem [thread:$0]  %s234, 2048, %s236, %s223, 128, 128, 8
        $region36: #{tpu_custom_call.1} parent=31 // pred_fallthru
          _
      $region32: #{tpu_custom_call.1} parent=5 // pred_fallthru
        _
      %p242 = scmp.le.s32.totalorder 1, %s19
      %p243 = scmp.lt.s32.totalorder %s19, 3
      %p244 = pnand %p242, %p243
      %p245 = pneg %p244
      // Predicated region
      $region37: #{tpu_custom_call.1} parent=5 // pred_check
        _
      $region38: #{tpu_custom_call.1} parent=5 // pred_check_branch
        %247 = sbr.rel (%p244) target = $region40
      $region39: #{tpu_custom_call.1} parent=5 // pred_region
        %s248 = ssub.s32 %s19, 1
        %s249 = sand.u32 %s32, 1
        %s250 = scalar_lea.sflag [#allocation3], %s249
        %s251 = sand.u32 %s32, 1
        %s252 = smul.addr %s251, 128
        %s253 = scalar_lea.vmem [#allocation2], %s252
        // Predicated region
        $region41: #{tpu_custom_call.1} parent=39 // pred_check
          %p254 = pneg %p45
        $region42: #{tpu_custom_call.1} parent=39 // pred_check_branch
          %256 = sbr.rel (%p254) target = $region44
        $region43: #{tpu_custom_call.1} parent=39 // pred_region
          %258 = dma.done %s250, 2048
        $region44: #{tpu_custom_call.1} parent=39 // pred_fallthru
          _
        // Predicated region
        $region45: #{tpu_custom_call.1} parent=39 // pred_check
          %p259 = pneg %p66
        $region46: #{tpu_custom_call.1} parent=39 // pred_check_branch
          %261 = sbr.rel (%p259) target = $region48
        $region47: #{tpu_custom_call.1} parent=39 // pred_region
          %263 = dma.done [#allocation6], 4096
        $region48: #{tpu_custom_call.1} parent=39 // pred_fallthru
          _
        // Predicated region
        $region49: #{tpu_custom_call.1} parent=39 // pred_check
          %p264 = pneg %p87
        $region50: #{tpu_custom_call.1} parent=39 // pred_check_branch
          %266 = sbr.rel (%p264) target = $region52
        $region51: #{tpu_custom_call.1} parent=39 // pred_region
          %268 = dma.done [#allocation6], 2048
        $region52: #{tpu_custom_call.1} parent=39 // pred_fallthru
          _
        // Predicated region
        $region53: #{tpu_custom_call.1} parent=39 // pred_check
          %p269 = pneg %p108
        $region54: #{tpu_custom_call.1} parent=39 // pred_check_branch
          %271 = sbr.rel (%p269) target = $region56
        $region55: #{tpu_custom_call.1} parent=39 // pred_region
          %273 = dma.done [#allocation9], 4096
        $region56: #{tpu_custom_call.1} parent=39 // pred_fallthru
          _
        %s274 = sand.u32 %s32, 1
        %s275 = scalar_lea.sflag [#allocation3], %s274
        %s276 = sand.u32 %s32, 1
        %s277 = smul.addr %s276, 128
        %s278 = scalar_lea.vmem [#allocation2], %s277
        %p279 = pneg %p45
        %p280 = pneg %p42
        %p281 = pneg %p66
        %p282 = pneg %p63
        %p283 = pneg %p87
        %p284 = pneg %p84
        %p285 = pneg %p108
        %p286 = pneg %p105
        %p287 = pneg %p129
        %p288 = pneg %p126
        %p289 = pneg %p155
        %p290 = pneg %p152
        %s291 = sand.u32 %s142, 1
        %s292 = scalar_lea.sflag [#allocation4], %s291
        %s293 = sand.u32 %s142, 1
        %s294 = smul.addr %s293, 8
        %s295 = scalar_lea.vmem [#allocation10], %s294
        %s296 = smul.u32 8, %s24
        %s297 = smul.u32 8, %s24
        %v298 = vld [vmem:[%s253] sm:$0xff]
        %v299 = vld [vmem:[%s253 + $0x8] sm:$0xff]
        %v300 = vld [vmem:[%s253 + $0x10] sm:$0xff]
        %v301 = vld [vmem:[%s253 + $0x18] sm:$0xff]
        %v302 = vld [vmem:[%s253 + $0x20] sm:$0xff]
        %v303 = vld [vmem:[%s253 + $0x28] sm:$0xff]
        %v304 = vld [vmem:[%s253 + $0x30] sm:$0xff]
        %v305 = vld [vmem:[%s253 + $0x38] sm:$0xff]
        %v306 = vld [vmem:[%s253 + $0x40] sm:$0xff]
        %v307 = vld [vmem:[%s253 + $0x48] sm:$0xff]
        %v308 = vld [vmem:[%s253 + $0x50] sm:$0xff]
        %v309 = vld [vmem:[%s253 + $0x58] sm:$0xff]
        %v310 = vld [vmem:[%s253 + $0x60] sm:$0xff]
        %v311 = vld [vmem:[%s253 + $0x68] sm:$0xff]
        %v312 = vld [vmem:[%s253 + $0x70] sm:$0xff]
        %v313 = vld [vmem:[%s253 + $0x78] sm:$0xff]
        %v314 = vld [vmem:[#allocation5] sm:$0xff]
        %v315 = vld [vmem:[#allocation5 + $0x8] sm:$0xff]
        %v316 = vld [vmem:[#allocation5 + $0x10] sm:$0xff]
        %v317 = vld [vmem:[#allocation5 + $0x18] sm:$0xff]
        %v318 = vld [vmem:[#allocation5 + $0x20] sm:$0xff]
        %v319 = vld [vmem:[#allocation5 + $0x28] sm:$0xff]
        %v320 = vld [vmem:[#allocation5 + $0x30] sm:$0xff]
        %v321 = vld [vmem:[#allocation5 + $0x38] sm:$0xff]
        %v322 = vld [vmem:[#allocation5 + $0x40] sm:$0xff]
        %v323 = vld [vmem:[#allocation5 + $0x48] sm:$0xff]
        %v324 = vld [vmem:[#allocation5 + $0x50] sm:$0xff]
        %v325 = vld [vmem:[#allocation5 + $0x58] sm:$0xff]
        %v326 = vld [vmem:[#allocation5 + $0x60] sm:$0xff]
        %v327 = vld [vmem:[#allocation5 + $0x68] sm:$0xff]
        %v328 = vld [vmem:[#allocation5 + $0x70] sm:$0xff]
        %v329 = vld [vmem:[#allocation5 + $0x78] sm:$0xff]
        %v330 = vld [vmem:[#allocation5 + $0x80] sm:$0xff]
        %v331 = vld [vmem:[#allocation5 + $0x88] sm:$0xff]
        %v332 = vld [vmem:[#allocation5 + $0x90] sm:$0xff]
        %v333 = vld [vmem:[#allocation5 + $0x98] sm:$0xff]
        %v334 = vld [vmem:[#allocation5 + $0xa0] sm:$0xff]
        %v335 = vld [vmem:[#allocation5 + $0xa8] sm:$0xff]
        %v336 = vld [vmem:[#allocation5 + $0xb0] sm:$0xff]
        %v337 = vld [vmem:[#allocation5 + $0xb8] sm:$0xff]
        %v338 = vld [vmem:[#allocation5 + $0xc0] sm:$0xff]
        %v339 = vld [vmem:[#allocation5 + $0xc8] sm:$0xff]
        %v340 = vld [vmem:[#allocation5 + $0xd0] sm:$0xff]
        %v341 = vld [vmem:[#allocation5 + $0xd8] sm:$0xff]
        %v342 = vld [vmem:[#allocation5 + $0xe0] sm:$0xff]
        %v343 = vld [vmem:[#allocation5 + $0xe8] sm:$0xff]
        %v344 = vld [vmem:[#allocation5 + $0xf0] sm:$0xff]
        %v345 = vld [vmem:[#allocation5 + $0xf8] sm:$0xff]
        %v362 = vunpack.c.l.b16 %v298
        %v363 = vunpack.c.h.b16 %v298
        %v364 = vunpack.c.l.b16 %v299
        %v365 = vunpack.c.h.b16 %v299
        %v366 = vunpack.c.l.b16 %v300
        %v367 = vunpack.c.h.b16 %v300
        %v368 = vunpack.c.l.b16 %v301
        %v369 = vunpack.c.h.b16 %v301
        %v370 = vunpack.c.l.b16 %v302
        %v371 = vunpack.c.h.b16 %v302
        %v372 = vunpack.c.l.b16 %v303
        %v373 = vunpack.c.h.b16 %v303
        %v374 = vunpack.c.l.b16 %v304
        %v375 = vunpack.c.h.b16 %v304
        %v376 = vunpack.c.l.b16 %v305
        %v377 = vunpack.c.h.b16 %v305
        %v378 = vunpack.c.l.b16 %v306
        %v379 = vunpack.c.h.b16 %v306
        %v380 = vunpack.c.l.b16 %v307
        %v381 = vunpack.c.h.b16 %v307
        %v382 = vunpack.c.l.b16 %v308
        %v383 = vunpack.c.h.b16 %v308
        %v384 = vunpack.c.l.b16 %v309
        %v385 = vunpack.c.h.b16 %v309
        %v386 = vunpack.c.l.b16 %v310
        %v387 = vunpack.c.h.b16 %v310
        %v388 = vunpack.c.l.b16 %v311
        %v389 = vunpack.c.h.b16 %v311
        %v390 = vunpack.c.l.b16 %v312
        %v391 = vunpack.c.h.b16 %v312
        %v392 = vunpack.c.l.b16 %v313
        %v393 = vunpack.c.h.b16 %v313
        %v394 = vpack.c.b16 %v364, %v362
        %v395 = vpack.c.b16 %v365, %v363
        %v396 = vpack.c.b16 %v368, %v366
        %v397 = vpack.c.b16 %v369, %v367
        %v398 = vpack.c.b16 %v372, %v370
        %v399 = vpack.c.b16 %v373, %v371
        %v400 = vpack.c.b16 %v376, %v374
        %v401 = vpack.c.b16 %v377, %v375
        %v402 = vpack.c.b16 %v380, %v378
        %v403 = vpack.c.b16 %v381, %v379
        %v404 = vpack.c.b16 %v384, %v382
        %v405 = vpack.c.b16 %v385, %v383
        %v406 = vpack.c.b16 %v388, %v386
        %v407 = vpack.c.b16 %v389, %v387
        %v408 = vpack.c.b16 %v392, %v390
        %v409 = vpack.c.b16 %v393, %v391
        %v458 = vunpack.c.l.b16 %v314
        %v459 = vunpack.c.h.b16 %v314
        %v460 = vunpack.c.l.b16 %v315
        %v461 = vunpack.c.h.b16 %v315
        %v462 = vunpack.c.l.b16 %v316
        %v463 = vunpack.c.h.b16 %v316
        %v464 = vunpack.c.l.b16 %v317
        %v465 = vunpack.c.h.b16 %v317
        %v466 = vunpack.c.l.b16 %v318
        %v467 = vunpack.c.h.b16 %v318
        %v468 = vunpack.c.l.b16 %v319
        %v469 = vunpack.c.h.b16 %v319
        %v470 = vunpack.c.l.b16 %v320
        %v471 = vunpack.c.h.b16 %v320
        %v472 = vunpack.c.l.b16 %v321
        %v473 = vunpack.c.h.b16 %v321
        %v474 = vunpack.c.l.b16 %v322
        %v475 = vunpack.c.h.b16 %v322
        %v476 = vunpack.c.l.b16 %v323
        %v477 = vunpack.c.h.b16 %v323
        %v478 = vunpack.c.l.b16 %v324
        %v479 = vunpack.c.h.b16 %v324
        %v480 = vunpack.c.l.b16 %v325
        %v481 = vunpack.c.h.b16 %v325
        %v482 = vunpack.c.l.b16 %v326
        %v483 = vunpack.c.h.b16 %v326
        %v484 = vunpack.c.l.b16 %v327
        %v485 = vunpack.c.h.b16 %v327
        %v486 = vunpack.c.l.b16 %v328
        %v487 = vunpack.c.h.b16 %v328
        %v488 = vunpack.c.l.b16 %v329
        %v489 = vunpack.c.h.b16 %v329
        %v490 = vunpack.c.l.b16 %v330
        %v491 = vunpack.c.h.b16 %v330
        %v492 = vunpack.c.l.b16 %v331
        %v493 = vunpack.c.h.b16 %v331
        %v494 = vunpack.c.l.b16 %v332
        %v495 = vunpack.c.h.b16 %v332
        %v496 = vunpack.c.l.b16 %v333
        %v497 = vunpack.c.h.b16 %v333
        %v498 = vunpack.c.l.b16 %v334
        %v499 = vunpack.c.h.b16 %v334
        %v500 = vunpack.c.l.b16 %v335
        %v501 = vunpack.c.h.b16 %v335
        %v502 = vunpack.c.l.b16 %v336
        %v503 = vunpack.c.h.b16 %v336
        %v504 = vunpack.c.l.b16 %v337
        %v505 = vunpack.c.h.b16 %v337
        %v506 = vunpack.c.l.b16 %v338
        %v507 = vunpack.c.h.b16 %v338
        %v508 = vunpack.c.l.b16 %v339
        %v509 = vunpack.c.h.b16 %v339
        %v510 = vunpack.c.l.b16 %v340
        %v511 = vunpack.c.h.b16 %v340
        %v512 = vunpack.c.l.b16 %v341
        %v513 = vunpack.c.h.b16 %v341
        %v514 = vunpack.c.l.b16 %v342
        %v515 = vunpack.c.h.b16 %v342
        %v516 = vunpack.c.l.b16 %v343
        %v517 = vunpack.c.h.b16 %v343
        %v518 = vunpack.c.l.b16 %v344
        %v519 = vunpack.c.h.b16 %v344
        %v520 = vunpack.c.l.b16 %v345
        %v521 = vunpack.c.h.b16 %v345
        %v522 = vpack.c.b16 %v460, %v458
        %v523 = vpack.c.b16 %v461, %v459
        %v524 = vpack.c.b16 %v464, %v462
        %v525 = vpack.c.b16 %v465, %v463
        %v526 = vpack.c.b16 %v468, %v466
        %v527 = vpack.c.b16 %v469, %v467
        %v528 = vpack.c.b16 %v472, %v470
        %v529 = vpack.c.b16 %v473, %v471
        %v530 = vpack.c.b16 %v476, %v474
        %v531 = vpack.c.b16 %v477, %v475
        %v532 = vpack.c.b16 %v480, %v478
        %v533 = vpack.c.b16 %v481, %v479
        %v534 = vpack.c.b16 %v484, %v482
        %v535 = vpack.c.b16 %v485, %v483
        %v536 = vpack.c.b16 %v488, %v486
        %v537 = vpack.c.b16 %v489, %v487
        %v538 = vpack.c.b16 %v492, %v490
        %v539 = vpack.c.b16 %v493, %v491
        %v540 = vpack.c.b16 %v496, %v494
        %v541 = vpack.c.b16 %v497, %v495
        %v542 = vpack.c.b16 %v500, %v498
        %v543 = vpack.c.b16 %v501, %v499
        %v544 = vpack.c.b16 %v504, %v502
        %v545 = vpack.c.b16 %v505, %v503
        %v546 = vpack.c.b16 %v508, %v506
        %v547 = vpack.c.b16 %v509, %v507
        %v548 = vpack.c.b16 %v512, %v510
        %v549 = vpack.c.b16 %v513, %v511
        %v550 = vpack.c.b16 %v516, %v514
        %v551 = vpack.c.b16 %v517, %v515
        %v552 = vpack.c.b16 %v520, %v518
        %v553 = vpack.c.b16 %v521, %v519
        %586 = vmatpush.bf16.msra.mxu0 %v536
        %587 = vmatpush.bf16.msra.mxu0 %v534
        %588 = vmatpush.bf16.msra.mxu0 %v532
        %589 = vmatpush.bf16.msra.mxu0 %v530
        %590 = vmatpush.bf16.msra.mxu0 %v528
        %591 = vmatpush.bf16.msra.mxu0 %v526
        %592 = vmatpush.bf16.msra.mxu0 %v524
        %593 = vmatpush.bf16.msra.mxu0 %v522
        %594 = vmatmul.bf16.gmra.mxu0 %v394
        %v595 = vpop.f32.mrf.mxu0
        %v596 = vadd.f32 0.0, %v595
        %v597 = vpop.f32.mrf.mxu0
        %v598 = vadd.f32 0.0, %v597
        %599 = vmatmul.bf16.gmra.mxu0 %v396
        %v600 = vpop.f32.mrf.mxu0
        %v601 = vadd.f32 0.0, %v600
        %v602 = vpop.f32.mrf.mxu0
        %v603 = vadd.f32 0.0, %v602
        %604 = vmatmul.bf16.gmra.mxu0 %v398
        %v605 = vpop.f32.mrf.mxu0
        %v606 = vadd.f32 0.0, %v605
        %v607 = vpop.f32.mrf.mxu0
        %v608 = vadd.f32 0.0, %v607
        %609 = vmatmul.bf16.gmra.mxu0 %v400
        %v610 = vpop.f32.mrf.mxu0
        %v611 = vadd.f32 0.0, %v610
        %v612 = vpop.f32.mrf.mxu0
        %v613 = vadd.f32 0.0, %v612
        %614 = vmatmul.bf16.gmra.mxu0 %v402
        %v615 = vpop.f32.mrf.mxu0
        %v616 = vadd.f32 0.0, %v615
        %v617 = vpop.f32.mrf.mxu0
        %v618 = vadd.f32 0.0, %v617
        %619 = vmatmul.bf16.gmra.mxu0 %v404
        %v620 = vpop.f32.mrf.mxu0
        %v621 = vadd.f32 0.0, %v620
        %v622 = vpop.f32.mrf.mxu0
        %v623 = vadd.f32 0.0, %v622
        %624 = vmatmul.bf16.gmra.mxu0 %v406
        %v625 = vpop.f32.mrf.mxu0
        %v626 = vadd.f32 0.0, %v625
        %v627 = vpop.f32.mrf.mxu0
        %v628 = vadd.f32 0.0, %v627
        %629 = vmatmul.bf16.gmra.mxu0 %v408
        %v630 = vpop.f32.mrf.mxu0
        %v631 = vadd.f32 0.0, %v630
        %v632 = vpop.f32.mrf.mxu0
        %v633 = vadd.f32 0.0, %v632
        %634 = vdwg.mxu0
        %635 = vmatpush.bf16.msra.mxu0 %v552
        %636 = vmatpush.bf16.msra.mxu0 %v550
        %637 = vmatpush.bf16.msra.mxu0 %v548
        %638 = vmatpush.bf16.msra.mxu0 %v546
        %639 = vmatpush.bf16.msra.mxu0 %v544
        %640 = vmatpush.bf16.msra.mxu0 %v542
        %641 = vmatpush.bf16.msra.mxu0 %v540
        %642 = vmatpush.bf16.msra.mxu0 %v538
        %643 = vmatmul.bf16.gmra.mxu0 %v395
        %v644 = vpop.f32.mrf.mxu0
        %v645 = vadd.f32 %v596, %v644
        %v646 = vpop.f32.mrf.mxu0
        %v647 = vadd.f32 %v598, %v646
        %648 = vmatmul.bf16.gmra.mxu0 %v397
        %v649 = vpop.f32.mrf.mxu0
        %v650 = vadd.f32 %v601, %v649
        %v651 = vpop.f32.mrf.mxu0
        %v652 = vadd.f32 %v603, %v651
        %653 = vmatmul.bf16.gmra.mxu0 %v399
        %v654 = vpop.f32.mrf.mxu0
        %v655 = vadd.f32 %v606, %v654
        %v656 = vpop.f32.mrf.mxu0
        %v657 = vadd.f32 %v608, %v656
        %658 = vmatmul.bf16.gmra.mxu0 %v401
        %v659 = vpop.f32.mrf.mxu0
        %v660 = vadd.f32 %v611, %v659
        %v661 = vpop.f32.mrf.mxu0
        %v662 = vadd.f32 %v613, %v661
        %663 = vmatmul.bf16.gmra.mxu0 %v403
        %v664 = vpop.f32.mrf.mxu0
        %v665 = vadd.f32 %v616, %v664
        %v666 = vpop.f32.mrf.mxu0
        %v667 = vadd.f32 %v618, %v666
        %668 = vmatmul.bf16.gmra.mxu0 %v405
        %v669 = vpop.f32.mrf.mxu0
        %v670 = vadd.f32 %v621, %v669
        %v671 = vpop.f32.mrf.mxu0
        %v672 = vadd.f32 %v623, %v671
        %673 = vmatmul.bf16.gmra.mxu0 %v407
        %v674 = vpop.f32.mrf.mxu0
        %v675 = vadd.f32 %v626, %v674
        %v676 = vpop.f32.mrf.mxu0
        %v677 = vadd.f32 %v628, %v676
        %678 = vmatmul.bf16.gmra.mxu0 %v409
        %v679 = vpop.f32.mrf.mxu0
        %v680 = vadd.f32 %v631, %v679
        %v681 = vpop.f32.mrf.mxu0
        %v682 = vadd.f32 %v633, %v681
        %683 = vdwg.mxu0
        %684 = vmatpush.bf16.msra.mxu0 %v537
        %685 = vmatpush.bf16.msra.mxu0 %v535
        %686 = vmatpush.bf16.msra.mxu0 %v533
        %687 = vmatpush.bf16.msra.mxu0 %v531
        %688 = vmatpush.bf16.msra.mxu0 %v529
        %689 = vmatpush.bf16.msra.mxu0 %v527
        %690 = vmatpush.bf16.msra.mxu0 %v525
        %691 = vmatpush.bf16.msra.mxu0 %v523
        %692 = vmatmul.bf16.gmra.mxu0 %v394
        %v693 = vpop.f32.mrf.mxu0
        %v694 = vadd.f32 0.0, %v693
        %v695 = vpop.f32.mrf.mxu0
        %v696 = vadd.f32 0.0, %v695
        %697 = vmatmul.bf16.gmra.mxu0 %v396
        %v698 = vpop.f32.mrf.mxu0
        %v699 = vadd.f32 0.0, %v698
        %v700 = vpop.f32.mrf.mxu0
        %v701 = vadd.f32 0.0, %v700
        %702 = vmatmul.bf16.gmra.mxu0 %v398
        %v703 = vpop.f32.mrf.mxu0
        %v704 = vadd.f32 0.0, %v703
        %v705 = vpop.f32.mrf.mxu0
        %v706 = vadd.f32 0.0, %v705
        %707 = vmatmul.bf16.gmra.mxu0 %v400
        %v708 = vpop.f32.mrf.mxu0
        %v709 = vadd.f32 0.0, %v708
        %v710 = vpop.f32.mrf.mxu0
        %v711 = vadd.f32 0.0, %v710
        %712 = vmatmul.bf16.gmra.mxu0 %v402
        %v713 = vpop.f32.mrf.mxu0
        %v714 = vadd.f32 0.0, %v713
        %v715 = vpop.f32.mrf.mxu0
        %v716 = vadd.f32 0.0, %v715
        %717 = vmatmul.bf16.gmra.mxu0 %v404
        %v718 = vpop.f32.mrf.mxu0
        %v719 = vadd.f32 0.0, %v718
        %v720 = vpop.f32.mrf.mxu0
        %v721 = vadd.f32 0.0, %v720
        %722 = vmatmul.bf16.gmra.mxu0 %v406
        %v723 = vpop.f32.mrf.mxu0
        %v724 = vadd.f32 0.0, %v723
        %v725 = vpop.f32.mrf.mxu0
        %v726 = vadd.f32 0.0, %v725
        %727 = vmatmul.bf16.gmra.mxu0 %v408
        %v728 = vpop.f32.mrf.mxu0
        %v729 = vadd.f32 0.0, %v728
        %v730 = vpop.f32.mrf.mxu0
        %v731 = vadd.f32 0.0, %v730
        %732 = vdwg.mxu0
        %733 = vmatpush.bf16.msra.mxu0 %v553
        %734 = vmatpush.bf16.msra.mxu0 %v551
        %735 = vmatpush.bf16.msra.mxu0 %v549
        %736 = vmatpush.bf16.msra.mxu0 %v547
        %737 = vmatpush.bf16.msra.mxu0 %v545
        %738 = vmatpush.bf16.msra.mxu0 %v543
        %739 = vmatpush.bf16.msra.mxu0 %v541
        %740 = vmatpush.bf16.msra.mxu0 %v539
        %741 = vmatmul.bf16.gmra.mxu0 %v395
        %v742 = vpop.f32.mrf.mxu0
        %v743 = vadd.f32 %v694, %v742
        %v744 = vpop.f32.mrf.mxu0
        %v745 = vadd.f32 %v696, %v744
        %746 = vmatmul.bf16.gmra.mxu0 %v397
        %v747 = vpop.f32.mrf.mxu0
        %v748 = vadd.f32 %v699, %v747
        %v749 = vpop.f32.mrf.mxu0
        %v750 = vadd.f32 %v701, %v749
        %751 = vmatmul.bf16.gmra.mxu0 %v399
        %v752 = vpop.f32.mrf.mxu0
        %v753 = vadd.f32 %v704, %v752
        %v754 = vpop.f32.mrf.mxu0
        %v755 = vadd.f32 %v706, %v754
        %756 = vmatmul.bf16.gmra.mxu0 %v401
        %v757 = vpop.f32.mrf.mxu0
        %v758 = vadd.f32 %v709, %v757
        %v759 = vpop.f32.mrf.mxu0
        %v760 = vadd.f32 %v711, %v759
        %761 = vmatmul.bf16.gmra.mxu0 %v403
        %v762 = vpop.f32.mrf.mxu0
        %v763 = vadd.f32 %v714, %v762
        %v764 = vpop.f32.mrf.mxu0
        %v765 = vadd.f32 %v716, %v764
        %766 = vmatmul.bf16.gmra.mxu0 %v405
        %v767 = vpop.f32.mrf.mxu0
        %v768 = vadd.f32 %v719, %v767
        %v769 = vpop.f32.mrf.mxu0
        %v770 = vadd.f32 %v721, %v769
        %771 = vmatmul.bf16.gmra.mxu0 %v407
        %v772 = vpop.f32.mrf.mxu0
        %v773 = vadd.f32 %v724, %v772
        %v774 = vpop.f32.mrf.mxu0
        %v775 = vadd.f32 %v726, %v774
        %776 = vmatmul.bf16.gmra.mxu0 %v409
        %v777 = vpop.f32.mrf.mxu0
        %v778 = vadd.f32 %v729, %v777
        %v779 = vpop.f32.mrf.mxu0
        %v780 = vadd.f32 %v731, %v779
        %781 = vdwg.mxu0
        %v782 = vtanh.pop %v645
        %v783 = vtanh.pop %v743
        %v784 = vtanh.pop %v647
        %v785 = vtanh.pop %v745
        %v786 = vtanh.pop %v650
        %v787 = vtanh.pop %v748
        %v788 = vtanh.pop %v652
        %v789 = vtanh.pop %v750
        %v790 = vtanh.pop %v655
        %v791 = vtanh.pop %v753
        %v792 = vtanh.pop %v657
        %v793 = vtanh.pop %v755
        %v794 = vtanh.pop %v660
        %v795 = vtanh.pop %v758
        %v796 = vtanh.pop %v662
        %v797 = vtanh.pop %v760
        %v798 = vtanh.pop %v665
        %v799 = vtanh.pop %v763
        %v800 = vtanh.pop %v667
        %v801 = vtanh.pop %v765
        %v802 = vtanh.pop %v670
        %v803 = vtanh.pop %v768
        %v804 = vtanh.pop %v672
        %v805 = vtanh.pop %v770
        %v806 = vtanh.pop %v675
        %v807 = vtanh.pop %v773
        %v808 = vtanh.pop %v677
        %v809 = vtanh.pop %v775
        %v810 = vtanh.pop %v680
        %v811 = vtanh.pop %v778
        %v812 = vtanh.pop %v682
        %v813 = vtanh.pop %v780
        %v814 = vpack.c.bf16 %v784, %v782
        %v815 = vpack.c.bf16 %v785, %v783
        %v816 = vpack.c.bf16 %v788, %v786
        %v817 = vpack.c.bf16 %v789, %v787
        %v818 = vpack.c.bf16 %v792, %v790
        %v819 = vpack.c.bf16 %v793, %v791
        %v820 = vpack.c.bf16 %v796, %v794
        %v821 = vpack.c.bf16 %v797, %v795
        %v822 = vpack.c.bf16 %v800, %v798
        %v823 = vpack.c.bf16 %v801, %v799
        %v824 = vpack.c.bf16 %v804, %v802
        %v825 = vpack.c.bf16 %v805, %v803
        %v826 = vpack.c.bf16 %v808, %v806
        %v827 = vpack.c.bf16 %v809, %v807
        %v828 = vpack.c.bf16 %v812, %v810
        %v829 = vpack.c.bf16 %v813, %v811
        %v830 = vld [vmem:[#allocation7] sm:$0xf]
        %v831 = vld [vmem:[#allocation7 + $0x4] sm:$0xf]
        %v832 = vld [vmem:[#allocation7 + $0x8] sm:$0xf]
        %v833 = vld [vmem:[#allocation7 + $0xc] sm:$0xf]
        %v834 = vld [vmem:[#allocation7 + $0x10] sm:$0xf]
        %v835 = vld [vmem:[#allocation7 + $0x14] sm:$0xf]
        %v836 = vld [vmem:[#allocation7 + $0x18] sm:$0xf]
        %v837 = vld [vmem:[#allocation7 + $0x1c] sm:$0xf]
        %v838 = vld [vmem:[#allocation7 + $0x20] sm:$0xf]
        %v839 = vld [vmem:[#allocation7 + $0x24] sm:$0xf]
        %v840 = vld [vmem:[#allocation7 + $0x28] sm:$0xf]
        %v841 = vld [vmem:[#allocation7 + $0x2c] sm:$0xf]
        %v842 = vld [vmem:[#allocation7 + $0x30] sm:$0xf]
        %v843 = vld [vmem:[#allocation7 + $0x34] sm:$0xf]
        %v844 = vld [vmem:[#allocation7 + $0x38] sm:$0xf]
        %v845 = vld [vmem:[#allocation7 + $0x3c] sm:$0xf]
        %v846 = vld [vmem:[#allocation7 + $0x40] sm:$0xf]
        %v847 = vld [vmem:[#allocation7 + $0x44] sm:$0xf]
        %v848 = vld [vmem:[#allocation7 + $0x48] sm:$0xf]
        %v849 = vld [vmem:[#allocation7 + $0x4c] sm:$0xf]
        %v850 = vld [vmem:[#allocation7 + $0x50] sm:$0xf]
        %v851 = vld [vmem:[#allocation7 + $0x54] sm:$0xf]
        %v852 = vld [vmem:[#allocation7 + $0x58] sm:$0xf]
        %v853 = vld [vmem:[#allocation7 + $0x5c] sm:$0xf]
        %v854 = vld [vmem:[#allocation7 + $0x60] sm:$0xf]
        %v855 = vld [vmem:[#allocation7 + $0x64] sm:$0xf]
        %v856 = vld [vmem:[#allocation7 + $0x68] sm:$0xf]
        %v857 = vld [vmem:[#allocation7 + $0x6c] sm:$0xf]
        %v858 = vld [vmem:[#allocation7 + $0x70] sm:$0xf]
        %v859 = vld [vmem:[#allocation7 + $0x74] sm:$0xf]
        %v860 = vld [vmem:[#allocation7 + $0x78] sm:$0xf]
        %v861 = vld [vmem:[#allocation7 + $0x7c] sm:$0xf]
        %v894 = vunpack.c.l.b16 %v830
        %v895 = vunpack.c.l.b16 %v831
        %v896 = vunpack.c.l.b16 %v832
        %v897 = vunpack.c.l.b16 %v833
        %v898 = vunpack.c.l.b16 %v834
        %v899 = vunpack.c.l.b16 %v835
        %v900 = vunpack.c.l.b16 %v836
        %v901 = vunpack.c.l.b16 %v837
        %v902 = vunpack.c.l.b16 %v838
        %v903 = vunpack.c.l.b16 %v839
        %v904 = vunpack.c.l.b16 %v840
        %v905 = vunpack.c.l.b16 %v841
        %v906 = vunpack.c.l.b16 %v842
        %v907 = vunpack.c.l.b16 %v843
        %v908 = vunpack.c.l.b16 %v844
        %v909 = vunpack.c.l.b16 %v845
        %v910 = vunpack.c.l.b16 %v846
        %v911 = vunpack.c.l.b16 %v847
        %v912 = vunpack.c.l.b16 %v848
        %v913 = vunpack.c.l.b16 %v849
        %v914 = vunpack.c.l.b16 %v850
        %v915 = vunpack.c.l.b16 %v851
        %v916 = vunpack.c.l.b16 %v852
        %v917 = vunpack.c.l.b16 %v853
        %v918 = vunpack.c.l.b16 %v854
        %v919 = vunpack.c.l.b16 %v855
        %v920 = vunpack.c.l.b16 %v856
        %v921 = vunpack.c.l.b16 %v857
        %v922 = vunpack.c.l.b16 %v858
        %v923 = vunpack.c.l.b16 %v859
        %v924 = vunpack.c.l.b16 %v860
        %v925 = vunpack.c.l.b16 %v861
        %v926 = vpack.c.b16 %v895, %v894
        %v927 = vpack.c.b16 %v897, %v896
        %v928 = vpack.c.b16 %v899, %v898
        %v929 = vpack.c.b16 %v901, %v900
        %v930 = vpack.c.b16 %v903, %v902
        %v931 = vpack.c.b16 %v905, %v904
        %v932 = vpack.c.b16 %v907, %v906
        %v933 = vpack.c.b16 %v909, %v908
        %v934 = vpack.c.b16 %v911, %v910
        %v935 = vpack.c.b16 %v913, %v912
        %v936 = vpack.c.b16 %v915, %v914
        %v937 = vpack.c.b16 %v917, %v916
        %v938 = vpack.c.b16 %v919, %v918
        %v939 = vpack.c.b16 %v921, %v920
        %v940 = vpack.c.b16 %v923, %v922
        %v941 = vpack.c.b16 %v925, %v924
        %958 = vmatpush.bf16.msra.mxu0 %v933
        %959 = vmatpush.bf16.msra.mxu0 %v932
        %960 = vmatpush.bf16.msra.mxu0 %v931
        %961 = vmatpush.bf16.msra.mxu0 %v930
        %962 = vmatpush.bf16.msra.mxu0 %v929
        %963 = vmatpush.bf16.msra.mxu0 %v928
        %964 = vmatpush.bf16.msra.mxu0 %v927
        %965 = vmatpush.bf16.msra.mxu0 %v926
        %966 = vmatmul.bf16.gmra.mxu0 %v814
        %v967 = vpop.f32.mrf.mxu0
        %v968 = vadd.f32 0.0, %v967
        %v969 = vpop.f32.mrf.mxu0
        %v970 = vadd.f32 0.0, %v969
        %971 = vmatmul.bf16.gmra.mxu0 %v816
        %v972 = vpop.f32.mrf.mxu0
        %v973 = vadd.f32 0.0, %v972
        %v974 = vpop.f32.mrf.mxu0
        %v975 = vadd.f32 0.0, %v974
        %976 = vmatmul.bf16.gmra.mxu0 %v818
        %v977 = vpop.f32.mrf.mxu0
        %v978 = vadd.f32 0.0, %v977
        %v979 = vpop.f32.mrf.mxu0
        %v980 = vadd.f32 0.0, %v979
        %981 = vmatmul.bf16.gmra.mxu0 %v820
        %v982 = vpop.f32.mrf.mxu0
        %v983 = vadd.f32 0.0, %v982
        %v984 = vpop.f32.mrf.mxu0
        %v985 = vadd.f32 0.0, %v984
        %986 = vmatmul.bf16.gmra.mxu0 %v822
        %v987 = vpop.f32.mrf.mxu0
        %v988 = vadd.f32 0.0, %v987
        %v989 = vpop.f32.mrf.mxu0
        %v990 = vadd.f32 0.0, %v989
        %991 = vmatmul.bf16.gmra.mxu0 %v824
        %v992 = vpop.f32.mrf.mxu0
        %v993 = vadd.f32 0.0, %v992
        %v994 = vpop.f32.mrf.mxu0
        %v995 = vadd.f32 0.0, %v994
        %996 = vmatmul.bf16.gmra.mxu0 %v826
        %v997 = vpop.f32.mrf.mxu0
        %v998 = vadd.f32 0.0, %v997
        %v999 = vpop.f32.mrf.mxu0
        %v1000 = vadd.f32 0.0, %v999
        %1001 = vmatmul.bf16.gmra.mxu0 %v828
        %v1002 = vpop.f32.mrf.mxu0
        %v1003 = vadd.f32 0.0, %v1002
        %v1004 = vpop.f32.mrf.mxu0
        %v1005 = vadd.f32 0.0, %v1004
        %1006 = vdwg.mxu0
        %1007 = vmatpush.bf16.msra.mxu0 %v941
        %1008 = vmatpush.bf16.msra.mxu0 %v940
        %1009 = vmatpush.bf16.msra.mxu0 %v939
        %1010 = vmatpush.bf16.msra.mxu0 %v938
        %1011 = vmatpush.bf16.msra.mxu0 %v937
        %1012 = vmatpush.bf16.msra.mxu0 %v936
        %1013 = vmatpush.bf16.msra.mxu0 %v935
        %1014 = vmatpush.bf16.msra.mxu0 %v934
        %1015 = vmatmul.bf16.gmra.mxu0 %v815
        %v1016 = vpop.f32.mrf.mxu0
        %v1017 = vadd.f32 %v968, %v1016
        %v1018 = vpop.f32.mrf.mxu0
        %v1019 = vadd.f32 %v970, %v1018
        %1020 = vmatmul.bf16.gmra.mxu0 %v817
        %v1021 = vpop.f32.mrf.mxu0
        %v1022 = vadd.f32 %v973, %v1021
        %v1023 = vpop.f32.mrf.mxu0
        %v1024 = vadd.f32 %v975, %v1023
        %1025 = vmatmul.bf16.gmra.mxu0 %v819
        %v1026 = vpop.f32.mrf.mxu0
        %v1027 = vadd.f32 %v978, %v1026
        %v1028 = vpop.f32.mrf.mxu0
        %v1029 = vadd.f32 %v980, %v1028
        %1030 = vmatmul.bf16.gmra.mxu0 %v821
        %v1031 = vpop.f32.mrf.mxu0
        %v1032 = vadd.f32 %v983, %v1031
        %v1033 = vpop.f32.mrf.mxu0
        %v1034 = vadd.f32 %v985, %v1033
        %1035 = vmatmul.bf16.gmra.mxu0 %v823
        %v1036 = vpop.f32.mrf.mxu0
        %v1037 = vadd.f32 %v988, %v1036
        %v1038 = vpop.f32.mrf.mxu0
        %v1039 = vadd.f32 %v990, %v1038
        %1040 = vmatmul.bf16.gmra.mxu0 %v825
        %v1041 = vpop.f32.mrf.mxu0
        %v1042 = vadd.f32 %v993, %v1041
        %v1043 = vpop.f32.mrf.mxu0
        %v1044 = vadd.f32 %v995, %v1043
        %1045 = vmatmul.bf16.gmra.mxu0 %v827
        %v1046 = vpop.f32.mrf.mxu0
        %v1047 = vadd.f32 %v998, %v1046
        %v1048 = vpop.f32.mrf.mxu0
        %v1049 = vadd.f32 %v1000, %v1048
        %1050 = vmatmul.bf16.gmra.mxu0 %v829
        %v1051 = vpop.f32.mrf.mxu0
        %v1052 = vadd.f32 %v1003, %v1051
        %v1053 = vpop.f32.mrf.mxu0
        %v1054 = vadd.f32 %v1005, %v1053
        %1055 = vdwg.mxu0
        %v1056 = vlaneseq
        %v1057 = vshrl.u32 %v1056, 7
        %v1058 = vadd.s32 %v1057, 8
        %vm1059 = vcmp.lt.s32.totalorder %v1057, 8
        %vm1060 = vcmp.lt.s32.totalorder %v1058, 8
        %v1061 = vsel %vm1059, 1, 0
        %v1062 = vsel %vm1060, 1, 0
        %vm1063 = vcmp.eq.s32.totalorder %v1061, 1
        %vm1064 = vcmp.eq.s32.totalorder %v1062, 1
        %v1065 = vsel %vm1063, %v1017, -1e+30
        %v1066 = vsel %vm1064, %v1019, -1e+30
        %v1067 = vsel %vm1063, %v1022, -1e+30
        %v1068 = vsel %vm1064, %v1024, -1e+30
        %v1069 = vsel %vm1063, %v1027, -1e+30
        %v1070 = vsel %vm1064, %v1029, -1e+30
        %v1071 = vsel %vm1063, %v1032, -1e+30
        %v1072 = vsel %vm1064, %v1034, -1e+30
        %v1073 = vsel %vm1063, %v1037, -1e+30
        %v1074 = vsel %vm1064, %v1039, -1e+30
        %v1075 = vsel %vm1063, %v1042, -1e+30
        %v1076 = vsel %vm1064, %v1044, -1e+30
        %v1077 = vsel %vm1063, %v1047, -1e+30
        %v1078 = vsel %vm1064, %v1049, -1e+30
        %v1079 = vsel %vm1063, %v1052, -1e+30
        %v1080 = vsel %vm1064, %v1054, -1e+30
        %vm1081 = vcmask 7168
        %v1082 = vsel %vm1081, %v1065, -inf
        %v1083 = vsel %vm1081, %v1066, -inf
        %v1084 = vmax.f32 %v1082, %v1083
        %v1085 = vrot.slane %v1084, 4
        %v1086 = vmax.f32 %v1084, %v1085
        %v1087 = vrot.slane %v1086, 2
        %v1088 = vmax.f32 %v1086, %v1087
        %v1089 = vrot.slane %v1088, 1
        %v1090 = vmax.f32 %v1088, %v1089
        %v1091 = vsel %vm1081, %v1067, -inf
        %v1092 = vsel %vm1081, %v1068, -inf
        %v1093 = vmax.f32 %v1091, %v1092
        %v1094 = vrot.slane %v1093, 4
        %v1095 = vmax.f32 %v1093, %v1094
        %v1096 = vrot.slane %v1095, 2
        %v1097 = vmax.f32 %v1095, %v1096
        %v1098 = vrot.slane %v1097, 1
        %v1099 = vmax.f32 %v1097, %v1098
        %v1100 = vsel %vm1081, %v1069, -inf
        %v1101 = vsel %vm1081, %v1070, -inf
        %v1102 = vmax.f32 %v1100, %v1101
        %v1103 = vrot.slane %v1102, 4
        %v1104 = vmax.f32 %v1102, %v1103
        %v1105 = vrot.slane %v1104, 2
        %v1106 = vmax.f32 %v1104, %v1105
        %v1107 = vrot.slane %v1106, 1
        %v1108 = vmax.f32 %v1106, %v1107
        %v1109 = vsel %vm1081, %v1071, -inf
        %v1110 = vsel %vm1081, %v1072, -inf
        %v1111 = vmax.f32 %v1109, %v1110
        %v1112 = vrot.slane %v1111, 4
        %v1113 = vmax.f32 %v1111, %v1112
        %v1114 = vrot.slane %v1113, 2
        %v1115 = vmax.f32 %v1113, %v1114
        %v1116 = vrot.slane %v1115, 1
        %v1117 = vmax.f32 %v1115, %v1116
        %v1118 = vsel %vm1081, %v1073, -inf
        %v1119 = vsel %vm1081, %v1074, -inf
        %v1120 = vmax.f32 %v1118, %v1119
        %v1121 = vrot.slane %v1120, 4
        %v1122 = vmax.f32 %v1120, %v1121
        %v1123 = vrot.slane %v1122, 2
        %v1124 = vmax.f32 %v1122, %v1123
        %v1125 = vrot.slane %v1124, 1
        %v1126 = vmax.f32 %v1124, %v1125
        %v1127 = vsel %vm1081, %v1075, -inf
        %v1128 = vsel %vm1081, %v1076, -inf
        %v1129 = vmax.f32 %v1127, %v1128
        %v1130 = vrot.slane %v1129, 4
        %v1131 = vmax.f32 %v1129, %v1130
        %v1132 = vrot.slane %v1131, 2
        %v1133 = vmax.f32 %v1131, %v1132
        %v1134 = vrot.slane %v1133, 1
        %v1135 = vmax.f32 %v1133, %v1134
        %v1136 = vsel %vm1081, %v1077, -inf
        %v1137 = vsel %vm1081, %v1078, -inf
        %v1138 = vmax.f32 %v1136, %v1137
        %v1139 = vrot.slane %v1138, 4
        %v1140 = vmax.f32 %v1138, %v1139
        %v1141 = vrot.slane %v1140, 2
        %v1142 = vmax.f32 %v1140, %v1141
        %v1143 = vrot.slane %v1142, 1
        %v1144 = vmax.f32 %v1142, %v1143
        %v1145 = vsel %vm1081, %v1079, -inf
        %v1146 = vsel %vm1081, %v1080, -inf
        %v1147 = vmax.f32 %v1145, %v1146
        %v1148 = vrot.slane %v1147, 4
        %v1149 = vmax.f32 %v1147, %v1148
        %v1150 = vrot.slane %v1149, 2
        %v1151 = vmax.f32 %v1149, %v1150
        %v1152 = vrot.slane %v1151, 1
        %v1153 = vmax.f32 %v1151, %v1152
        %v1154 = vsub.f32 %v1065, %v1090
        %v1155 = vsub.f32 %v1066, %v1090
        %v1156 = vsub.f32 %v1067, %v1099
        %v1157 = vsub.f32 %v1068, %v1099
        %v1158 = vsub.f32 %v1069, %v1108
        %v1159 = vsub.f32 %v1070, %v1108
        %v1160 = vsub.f32 %v1071, %v1117
        %v1161 = vsub.f32 %v1072, %v1117
        %v1162 = vsub.f32 %v1073, %v1126
        %v1163 = vsub.f32 %v1074, %v1126
        %v1164 = vsub.f32 %v1075, %v1135
        %v1165 = vsub.f32 %v1076, %v1135
        %v1166 = vsub.f32 %v1077, %v1144
        %v1167 = vsub.f32 %v1078, %v1144
        %v1168 = vsub.f32 %v1079, %v1153
        %v1169 = vsub.f32 %v1080, %v1153
        %v1170 = vmul.f32 %v1154, 1.442695
        %v1171 = vpow.pop %v1170
        %v1172 = vmul.f32 %v1155, 1.442695
        %v1173 = vpow.pop %v1172
        %v1174 = vmul.f32 %v1156, 1.442695
        %v1175 = vpow.pop %v1174
        %v1176 = vmul.f32 %v1157, 1.442695
        %v1177 = vpow.pop %v1176
        %v1178 = vmul.f32 %v1158, 1.442695
        %v1179 = vpow.pop %v1178
        %v1180 = vmul.f32 %v1159, 1.442695
        %v1181 = vpow.pop %v1180
        %v1182 = vmul.f32 %v1160, 1.442695
        %v1183 = vpow.pop %v1182
        %v1184 = vmul.f32 %v1161, 1.442695
        %v1185 = vpow.pop %v1184
        %v1186 = vmul.f32 %v1162, 1.442695
        %v1187 = vpow.pop %v1186
        %v1188 = vmul.f32 %v1163, 1.442695
        %v1189 = vpow.pop %v1188
        %v1190 = vmul.f32 %v1164, 1.442695
        %v1191 = vpow.pop %v1190
        %v1192 = vmul.f32 %v1165, 1.442695
        %v1193 = vpow.pop %v1192
        %v1194 = vmul.f32 %v1166, 1.442695
        %v1195 = vpow.pop %v1194
        %v1196 = vmul.f32 %v1167, 1.442695
        %v1197 = vpow.pop %v1196
        %v1198 = vmul.f32 %v1168, 1.442695
        %v1199 = vpow.pop %v1198
        %v1200 = vmul.f32 %v1169, 1.442695
        %v1201 = vpow.pop %v1200
        %v1202 = vsel %vm1081, %v1171, 0.0
        %v1203 = vsel %vm1081, %v1173, 0.0
        %v1204 = vadd.f32 %v1202, %v1203
        %v1205 = vrot.slane %v1204, 4
        %v1206 = vadd.f32 %v1204, %v1205
        %v1207 = vrot.slane %v1206, 2
        %v1208 = vadd.f32 %v1206, %v1207
        %v1209 = vrot.slane %v1208, 1
        %v1210 = vadd.f32 %v1208, %v1209
        %v1211 = vsel %vm1081, %v1175, 0.0
        %v1212 = vsel %vm1081, %v1177, 0.0
        %v1213 = vadd.f32 %v1211, %v1212
        %v1214 = vrot.slane %v1213, 4
        %v1215 = vadd.f32 %v1213, %v1214
        %v1216 = vrot.slane %v1215, 2
        %v1217 = vadd.f32 %v1215, %v1216
        %v1218 = vrot.slane %v1217, 1
        %v1219 = vadd.f32 %v1217, %v1218
        %v1220 = vsel %vm1081, %v1179, 0.0
        %v1221 = vsel %vm1081, %v1181, 0.0
        %v1222 = vadd.f32 %v1220, %v1221
        %v1223 = vrot.slane %v1222, 4
        %v1224 = vadd.f32 %v1222, %v1223
        %v1225 = vrot.slane %v1224, 2
        %v1226 = vadd.f32 %v1224, %v1225
        %v1227 = vrot.slane %v1226, 1
        %v1228 = vadd.f32 %v1226, %v1227
        %v1229 = vsel %vm1081, %v1183, 0.0
        %v1230 = vsel %vm1081, %v1185, 0.0
        %v1231 = vadd.f32 %v1229, %v1230
        %v1232 = vrot.slane %v1231, 4
        %v1233 = vadd.f32 %v1231, %v1232
        %v1234 = vrot.slane %v1233, 2
        %v1235 = vadd.f32 %v1233, %v1234
        %v1236 = vrot.slane %v1235, 1
        %v1237 = vadd.f32 %v1235, %v1236
        %v1238 = vsel %vm1081, %v1187, 0.0
        %v1239 = vsel %vm1081, %v1189, 0.0
        %v1240 = vadd.f32 %v1238, %v1239
        %v1241 = vrot.slane %v1240, 4
        %v1242 = vadd.f32 %v1240, %v1241
        %v1243 = vrot.slane %v1242, 2
        %v1244 = vadd.f32 %v1242, %v1243
        %v1245 = vrot.slane %v1244, 1
        %v1246 = vadd.f32 %v1244, %v1245
        %v1247 = vsel %vm1081, %v1191, 0.0
        %v1248 = vsel %vm1081, %v1193, 0.0
        %v1249 = vadd.f32 %v1247, %v1248
        %v1250 = vrot.slane %v1249, 4
        %v1251 = vadd.f32 %v1249, %v1250
        %v1252 = vrot.slane %v1251, 2
        %v1253 = vadd.f32 %v1251, %v1252
        %v1254 = vrot.slane %v1253, 1
        %v1255 = vadd.f32 %v1253, %v1254
        %v1256 = vsel %vm1081, %v1195, 0.0
        %v1257 = vsel %vm1081, %v1197, 0.0
        %v1258 = vadd.f32 %v1256, %v1257
        %v1259 = vrot.slane %v1258, 4
        %v1260 = vadd.f32 %v1258, %v1259
        %v1261 = vrot.slane %v1260, 2
        %v1262 = vadd.f32 %v1260, %v1261
        %v1263 = vrot.slane %v1262, 1
        %v1264 = vadd.f32 %v1262, %v1263
        %v1265 = vsel %vm1081, %v1199, 0.0
        %v1266 = vsel %vm1081, %v1201, 0.0
        %v1267 = vadd.f32 %v1265, %v1266
        %v1268 = vrot.slane %v1267, 4
        %v1269 = vadd.f32 %v1267, %v1268
        %v1270 = vrot.slane %v1269, 2
        %v1271 = vadd.f32 %v1269, %v1270
        %v1272 = vrot.slane %v1271, 1
        %v1273 = vadd.f32 %v1271, %v1272
        %v1274 = vrcp.pop %v1210
        %v1275 = vmul.f32 %v1210, %v1274
        %v1276 = vsub.f32 1.0, %v1275
        %v1277 = vmul.f32 %v1274, %v1276
        %v1278 = vadd.f32 %v1274, %v1277
        %vm1279 = vweird.f32 %v1210
        %vm1280 = vweird.f32 %v1274
        %vm1281 = vmor %vm1279, %vm1280
        %v1282 = vsel %vm1281, %v1274, %v1278
        %v1283 = vand.u32 2147483647, %v1210
        %vm1284 = vcmp.eq.f32.partialorder %v1283, 8.507059e+37
        %v1285 = vand.u32 %v1210, 2147483648
        %v1286 = vor.u32 1.1754944e-38, %v1285
        %v1287 = vsel %vm1284, %v1286, %v1282
        %v1288 = vmul.f32 %v1171, %v1287
        %v1289 = vmul.f32 %v1173, %v1287
        %v1290 = vrcp.pop %v1219
        %v1291 = vmul.f32 %v1219, %v1290
        %v1292 = vsub.f32 1.0, %v1291
        %v1293 = vmul.f32 %v1290, %v1292
        %v1294 = vadd.f32 %v1290, %v1293
        %vm1295 = vweird.f32 %v1219
        %vm1296 = vweird.f32 %v1290
        %vm1297 = vmor %vm1295, %vm1296
        %v1298 = vsel %vm1297, %v1290, %v1294
        %v1299 = vand.u32 2147483647, %v1219
        %vm1300 = vcmp.eq.f32.partialorder %v1299, 8.507059e+37
        %v1301 = vand.u32 %v1219, 2147483648
        %v1302 = vor.u32 1.1754944e-38, %v1301
        %v1303 = vsel %vm1300, %v1302, %v1298
        %v1304 = vmul.f32 %v1175, %v1303
        %v1305 = vmul.f32 %v1177, %v1303
        %v1306 = vrcp.pop %v1228
        %v1307 = vmul.f32 %v1228, %v1306
        %v1308 = vsub.f32 1.0, %v1307
        %v1309 = vmul.f32 %v1306, %v1308
        %v1310 = vadd.f32 %v1306, %v1309
        %vm1311 = vweird.f32 %v1228
        %vm1312 = vweird.f32 %v1306
        %vm1313 = vmor %vm1311, %vm1312
        %v1314 = vsel %vm1313, %v1306, %v1310
        %v1315 = vand.u32 2147483647, %v1228
        %vm1316 = vcmp.eq.f32.partialorder %v1315, 8.507059e+37
        %v1317 = vand.u32 %v1228, 2147483648
        %v1318 = vor.u32 1.1754944e-38, %v1317
        %v1319 = vsel %vm1316, %v1318, %v1314
        %v1320 = vmul.f32 %v1179, %v1319
        %v1321 = vmul.f32 %v1181, %v1319
        %v1322 = vrcp.pop %v1237
        %v1323 = vmul.f32 %v1237, %v1322
        %v1324 = vsub.f32 1.0, %v1323
        %v1325 = vmul.f32 %v1322, %v1324
        %v1326 = vadd.f32 %v1322, %v1325
        %vm1327 = vweird.f32 %v1237
        %vm1328 = vweird.f32 %v1322
        %vm1329 = vmor %vm1327, %vm1328
        %v1330 = vsel %vm1329, %v1322, %v1326
        %v1331 = vand.u32 2147483647, %v1237
        %vm1332 = vcmp.eq.f32.partialorder %v1331, 8.507059e+37
        %v1333 = vand.u32 %v1237, 2147483648
        %v1334 = vor.u32 1.1754944e-38, %v1333
        %v1335 = vsel %vm1332, %v1334, %v1330
        %v1336 = vmul.f32 %v1183, %v1335
        %v1337 = vmul.f32 %v1185, %v1335
        %v1338 = vrcp.pop %v1246
        %v1339 = vmul.f32 %v1246, %v1338
        %v1340 = vsub.f32 1.0, %v1339
        %v1341 = vmul.f32 %v1338, %v1340
        %v1342 = vadd.f32 %v1338, %v1341
        %vm1343 = vweird.f32 %v1246
        %vm1344 = vweird.f32 %v1338
        %vm1345 = vmor %vm1343, %vm1344
        %v1346 = vsel %vm1345, %v1338, %v1342
        %v1347 = vand.u32 2147483647, %v1246
        %vm1348 = vcmp.eq.f32.partialorder %v1347, 8.507059e+37
        %v1349 = vand.u32 %v1246, 2147483648
        %v1350 = vor.u32 1.1754944e-38, %v1349
        %v1351 = vsel %vm1348, %v1350, %v1346
        %v1352 = vmul.f32 %v1187, %v1351
        %v1353 = vmul.f32 %v1189, %v1351
        %v1354 = vrcp.pop %v1255
        %v1355 = vmul.f32 %v1255, %v1354
        %v1356 = vsub.f32 1.0, %v1355
        %v1357 = vmul.f32 %v1354, %v1356
        %v1358 = vadd.f32 %v1354, %v1357
        %vm1359 = vweird.f32 %v1255
        %vm1360 = vweird.f32 %v1354
        %vm1361 = vmor %vm1359, %vm1360
        %v1362 = vsel %vm1361, %v1354, %v1358
        %v1363 = vand.u32 2147483647, %v1255
        %vm1364 = vcmp.eq.f32.partialorder %v1363, 8.507059e+37
        %v1365 = vand.u32 %v1255, 2147483648
        %v1366 = vor.u32 1.1754944e-38, %v1365
        %v1367 = vsel %vm1364, %v1366, %v1362
        %v1368 = vmul.f32 %v1191, %v1367
        %v1369 = vmul.f32 %v1193, %v1367
        %v1370 = vrcp.pop %v1264
        %v1371 = vmul.f32 %v1264, %v1370
        %v1372 = vsub.f32 1.0, %v1371
        %v1373 = vmul.f32 %v1370, %v1372
        %v1374 = vadd.f32 %v1370, %v1373
        %vm1375 = vweird.f32 %v1264
        %vm1376 = vweird.f32 %v1370
        %vm1377 = vmor %vm1375, %vm1376
        %v1378 = vsel %vm1377, %v1370, %v1374
        %v1379 = vand.u32 2147483647, %v1264
        %vm1380 = vcmp.eq.f32.partialorder %v1379, 8.507059e+37
        %v1381 = vand.u32 %v1264, 2147483648
        %v1382 = vor.u32 1.1754944e-38, %v1381
        %v1383 = vsel %vm1380, %v1382, %v1378
        %v1384 = vmul.f32 %v1195, %v1383
        %v1385 = vmul.f32 %v1197, %v1383
        %v1386 = vrcp.pop %v1273
        %v1387 = vmul.f32 %v1273, %v1386
        %v1388 = vsub.f32 1.0, %v1387
        %v1389 = vmul.f32 %v1386, %v1388
        %v1390 = vadd.f32 %v1386, %v1389
        %vm1391 = vweird.f32 %v1273
        %vm1392 = vweird.f32 %v1386
        %vm1393 = vmor %vm1391, %vm1392
        %v1394 = vsel %vm1393, %v1386, %v1390
        %v1395 = vand.u32 2147483647, %v1273
        %vm1396 = vcmp.eq.f32.partialorder %v1395, 8.507059e+37
        %v1397 = vand.u32 %v1273, 2147483648
        %v1398 = vor.u32 1.1754944e-38, %v1397
        %v1399 = vsel %vm1396, %v1398, %v1394
        %v1400 = vmul.f32 %v1199, %v1399
        %v1401 = vmul.f32 %v1201, %v1399
        %v1402 = vunpack.c.l.bf16 %v298
        %v1403 = vunpack.c.h.bf16 %v298
        %v1404 = vunpack.c.l.bf16 %v299
        %v1405 = vunpack.c.h.bf16 %v299
        %v1406 = vunpack.c.l.bf16 %v300
        %v1407 = vunpack.c.h.bf16 %v300
        %v1408 = vunpack.c.l.bf16 %v301
        %v1409 = vunpack.c.h.bf16 %v301
        %v1410 = vunpack.c.l.bf16 %v302
        %v1411 = vunpack.c.h.bf16 %v302
        %v1412 = vunpack.c.l.bf16 %v303
        %v1413 = vunpack.c.h.bf16 %v303
        %v1414 = vunpack.c.l.bf16 %v304
        %v1415 = vunpack.c.h.bf16 %v304
        %v1416 = vunpack.c.l.bf16 %v305
        %v1417 = vunpack.c.h.bf16 %v305
        %v1418 = vunpack.c.l.bf16 %v306
        %v1419 = vunpack.c.h.bf16 %v306
        %v1420 = vunpack.c.l.bf16 %v307
        %v1421 = vunpack.c.h.bf16 %v307
        %v1422 = vunpack.c.l.bf16 %v308
        %v1423 = vunpack.c.h.bf16 %v308
        %v1424 = vunpack.c.l.bf16 %v309
        %v1425 = vunpack.c.h.bf16 %v309
        %v1426 = vunpack.c.l.bf16 %v310
        %v1427 = vunpack.c.h.bf16 %v310
        %v1428 = vunpack.c.l.bf16 %v311
        %v1429 = vunpack.c.h.bf16 %v311
        %v1430 = vunpack.c.l.bf16 %v312
        %v1431 = vunpack.c.h.bf16 %v312
        %v1432 = vunpack.c.l.bf16 %v313
        %v1433 = vunpack.c.h.bf16 %v313
        %1435 = vset.pattern.permute.xlu0 0
        %1436 = vperm.xlu0 %1435, %v1288
        %v1437 = vpop.permute.xlu0 %1436
        %1440 = vset.pattern.permute.xlu0 0
        %1441 = vperm.xlu0 %1440, %v1289
        %v1442 = vpop.permute.xlu0 %1441
        %1445 = vset.pattern.permute.xlu0 0
        %1446 = vperm.xlu0 %1445, %v1304
        %v1447 = vpop.permute.xlu0 %1446
        %1450 = vset.pattern.permute.xlu0 0
        %1451 = vperm.xlu0 %1450, %v1305
        %v1452 = vpop.permute.xlu0 %1451
        %1455 = vset.pattern.permute.xlu0 0
        %1456 = vperm.xlu0 %1455, %v1320
        %v1457 = vpop.permute.xlu0 %1456
        %1460 = vset.pattern.permute.xlu0 0
        %1461 = vperm.xlu0 %1460, %v1321
        %v1462 = vpop.permute.xlu0 %1461
        %1465 = vset.pattern.permute.xlu0 0
        %1466 = vperm.xlu0 %1465, %v1336
        %v1467 = vpop.permute.xlu0 %1466
        %1470 = vset.pattern.permute.xlu0 0
        %1471 = vperm.xlu0 %1470, %v1337
        %v1472 = vpop.permute.xlu0 %1471
        %1475 = vset.pattern.permute.xlu0 0
        %1476 = vperm.xlu0 %1475, %v1352
        %v1477 = vpop.permute.xlu0 %1476
        %1480 = vset.pattern.permute.xlu0 0
        %1481 = vperm.xlu0 %1480, %v1353
        %v1482 = vpop.permute.xlu0 %1481
        %1485 = vset.pattern.permute.xlu0 0
        %1486 = vperm.xlu0 %1485, %v1368
        %v1487 = vpop.permute.xlu0 %1486
        %1490 = vset.pattern.permute.xlu0 0
        %1491 = vperm.xlu0 %1490, %v1369
        %v1492 = vpop.permute.xlu0 %1491
        %1495 = vset.pattern.permute.xlu0 0
        %1496 = vperm.xlu0 %1495, %v1384
        %v1497 = vpop.permute.xlu0 %1496
        %1500 = vset.pattern.permute.xlu0 0
        %1501 = vperm.xlu0 %1500, %v1385
        %v1502 = vpop.permute.xlu0 %1501
        %1505 = vset.pattern.permute.xlu0 0
        %1506 = vperm.xlu0 %1505, %v1400
        %v1507 = vpop.permute.xlu0 %1506
        %1510 = vset.pattern.permute.xlu0 0
        %1511 = vperm.xlu0 %1510, %v1401
        %v1512 = vpop.permute.xlu0 %1511
        %v1514 = vmul.f32 %v1437, %v1402
        %v1515 = vmul.f32 %v1437, %v1403
        %v1516 = vmul.f32 %v1442, %v1404
        %v1517 = vmul.f32 %v1442, %v1405
        %v1518 = vmul.f32 %v1447, %v1406
        %v1519 = vmul.f32 %v1447, %v1407
        %v1520 = vmul.f32 %v1452, %v1408
        %v1521 = vmul.f32 %v1452, %v1409
        %v1522 = vmul.f32 %v1457, %v1410
        %v1523 = vmul.f32 %v1457, %v1411
        %v1524 = vmul.f32 %v1462, %v1412
        %v1525 = vmul.f32 %v1462, %v1413
        %v1526 = vmul.f32 %v1467, %v1414
        %v1527 = vmul.f32 %v1467, %v1415
        %v1528 = vmul.f32 %v1472, %v1416
        %v1529 = vmul.f32 %v1472, %v1417
        %v1530 = vmul.f32 %v1477, %v1418
        %v1531 = vmul.f32 %v1477, %v1419
        %v1532 = vmul.f32 %v1482, %v1420
        %v1533 = vmul.f32 %v1482, %v1421
        %v1534 = vmul.f32 %v1487, %v1422
        %v1535 = vmul.f32 %v1487, %v1423
        %v1536 = vmul.f32 %v1492, %v1424
        %v1537 = vmul.f32 %v1492, %v1425
        %v1538 = vmul.f32 %v1497, %v1426
        %v1539 = vmul.f32 %v1497, %v1427
        %v1540 = vmul.f32 %v1502, %v1428
        %v1541 = vmul.f32 %v1502, %v1429
        %v1542 = vmul.f32 %v1507, %v1430
        %v1543 = vmul.f32 %v1507, %v1431
        %v1544 = vmul.f32 %v1512, %v1432
        %v1545 = vmul.f32 %v1512, %v1433
        %v1546 = vadd.f32 %v1514, %v1516
        %v1547 = vrot.slane %v1546, 4
        %v1548 = vadd.f32 %v1546, %v1547
        %v1549 = vrot.slane %v1548, 2
        %v1550 = vadd.f32 %v1548, %v1549
        %v1551 = vrot.slane %v1550, 1
        %v1552 = vadd.f32 %v1550, %v1551
        %v1553 = vadd.f32 %v1515, %v1517
        %v1554 = vrot.slane %v1553, 4
        %v1555 = vadd.f32 %v1553, %v1554
        %v1556 = vrot.slane %v1555, 2
        %v1557 = vadd.f32 %v1555, %v1556
        %v1558 = vrot.slane %v1557, 1
        %v1559 = vadd.f32 %v1557, %v1558
        %v1560 = vadd.f32 %v1518, %v1520
        %v1561 = vrot.slane %v1560, 4
        %v1562 = vadd.f32 %v1560, %v1561
        %v1563 = vrot.slane %v1562, 2
        %v1564 = vadd.f32 %v1562, %v1563
        %v1565 = vrot.slane %v1564, 1
        %v1566 = vadd.f32 %v1564, %v1565
        %v1567 = vadd.f32 %v1519, %v1521
        %v1568 = vrot.slane %v1567, 4
        %v1569 = vadd.f32 %v1567, %v1568
        %v1570 = vrot.slane %v1569, 2
        %v1571 = vadd.f32 %v1569, %v1570
        %v1572 = vrot.slane %v1571, 1
        %v1573 = vadd.f32 %v1571, %v1572
        %v1574 = vadd.f32 %v1522, %v1524
        %v1575 = vrot.slane %v1574, 4
        %v1576 = vadd.f32 %v1574, %v1575
        %v1577 = vrot.slane %v1576, 2
        %v1578 = vadd.f32 %v1576, %v1577
        %v1579 = vrot.slane %v1578, 1
        %v1580 = vadd.f32 %v1578, %v1579
        %v1581 = vadd.f32 %v1523, %v1525
        %v1582 = vrot.slane %v1581, 4
        %v1583 = vadd.f32 %v1581, %v1582
        %v1584 = vrot.slane %v1583, 2
        %v1585 = vadd.f32 %v1583, %v1584
        %v1586 = vrot.slane %v1585, 1
        %v1587 = vadd.f32 %v1585, %v1586
        %v1588 = vadd.f32 %v1526, %v1528
        %v1589 = vrot.slane %v1588, 4
        %v1590 = vadd.f32 %v1588, %v1589
        %v1591 = vrot.slane %v1590, 2
        %v1592 = vadd.f32 %v1590, %v1591
        %v1593 = vrot.slane %v1592, 1
        %v1594 = vadd.f32 %v1592, %v1593
        %v1595 = vadd.f32 %v1527, %v1529
        %v1596 = vrot.slane %v1595, 4
        %v1597 = vadd.f32 %v1595, %v1596
        %v1598 = vrot.slane %v1597, 2
        %v1599 = vadd.f32 %v1597, %v1598
        %v1600 = vrot.slane %v1599, 1
        %v1601 = vadd.f32 %v1599, %v1600
        %v1602 = vadd.f32 %v1530, %v1532
        %v1603 = vrot.slane %v1602, 4
        %v1604 = vadd.f32 %v1602, %v1603
        %v1605 = vrot.slane %v1604, 2
        %v1606 = vadd.f32 %v1604, %v1605
        %v1607 = vrot.slane %v1606, 1
        %v1608 = vadd.f32 %v1606, %v1607
        %v1609 = vadd.f32 %v1531, %v1533
        %v1610 = vrot.slane %v1609, 4
        %v1611 = vadd.f32 %v1609, %v1610
        %v1612 = vrot.slane %v1611, 2
        %v1613 = vadd.f32 %v1611, %v1612
        %v1614 = vrot.slane %v1613, 1
        %v1615 = vadd.f32 %v1613, %v1614
        %v1616 = vadd.f32 %v1534, %v1536
        %v1617 = vrot.slane %v1616, 4
        %v1618 = vadd.f32 %v1616, %v1617
        %v1619 = vrot.slane %v1618, 2
        %v1620 = vadd.f32 %v1618, %v1619
        %v1621 = vrot.slane %v1620, 1
        %v1622 = vadd.f32 %v1620, %v1621
        %v1623 = vadd.f32 %v1535, %v1537
        %v1624 = vrot.slane %v1623, 4
        %v1625 = vadd.f32 %v1623, %v1624
        %v1626 = vrot.slane %v1625, 2
        %v1627 = vadd.f32 %v1625, %v1626
        %v1628 = vrot.slane %v1627, 1
        %v1629 = vadd.f32 %v1627, %v1628
        %v1630 = vadd.f32 %v1538, %v1540
        %v1631 = vrot.slane %v1630, 4
        %v1632 = vadd.f32 %v1630, %v1631
        %v1633 = vrot.slane %v1632, 2
        %v1634 = vadd.f32 %v1632, %v1633
        %v1635 = vrot.slane %v1634, 1
        %v1636 = vadd.f32 %v1634, %v1635
        %v1637 = vadd.f32 %v1539, %v1541
        %v1638 = vrot.slane %v1637, 4
        %v1639 = vadd.f32 %v1637, %v1638
        %v1640 = vrot.slane %v1639, 2
        %v1641 = vadd.f32 %v1639, %v1640
        %v1642 = vrot.slane %v1641, 1
        %v1643 = vadd.f32 %v1641, %v1642
        %v1644 = vadd.f32 %v1542, %v1544
        %v1645 = vrot.slane %v1644, 4
        %v1646 = vadd.f32 %v1644, %v1645
        %v1647 = vrot.slane %v1646, 2
        %v1648 = vadd.f32 %v1646, %v1647
        %v1649 = vrot.slane %v1648, 1
        %v1650 = vadd.f32 %v1648, %v1649
        %v1651 = vadd.f32 %v1543, %v1545
        %v1652 = vrot.slane %v1651, 4
        %v1653 = vadd.f32 %v1651, %v1652
        %v1654 = vrot.slane %v1653, 2
        %v1655 = vadd.f32 %v1653, %v1654
        %v1656 = vrot.slane %v1655, 1
        %v1657 = vadd.f32 %v1655, %v1656
        %v1658 = vld [vmem:[#allocation8] sm:$0xff]
        %v1659 = vld [vmem:[#allocation8 + $0x8] sm:$0xff]
        %v1660 = vld [vmem:[#allocation8 + $0x10] sm:$0xff]
        %v1661 = vld [vmem:[#allocation8 + $0x18] sm:$0xff]
        %v1662 = vld [vmem:[#allocation8 + $0x20] sm:$0xff]
        %v1663 = vld [vmem:[#allocation8 + $0x28] sm:$0xff]
        %v1664 = vld [vmem:[#allocation8 + $0x30] sm:$0xff]
        %v1665 = vld [vmem:[#allocation8 + $0x38] sm:$0xff]
        %v1666 = vld [vmem:[#allocation8 + $0x40] sm:$0xff]
        %v1667 = vld [vmem:[#allocation8 + $0x48] sm:$0xff]
        %v1668 = vld [vmem:[#allocation8 + $0x50] sm:$0xff]
        %v1669 = vld [vmem:[#allocation8 + $0x58] sm:$0xff]
        %v1670 = vld [vmem:[#allocation8 + $0x60] sm:$0xff]
        %v1671 = vld [vmem:[#allocation8 + $0x68] sm:$0xff]
        %v1672 = vld [vmem:[#allocation8 + $0x70] sm:$0xff]
        %v1673 = vld [vmem:[#allocation8 + $0x78] sm:$0xff]
        %v1674 = vld [vmem:[#allocation8 + $0x80] sm:$0xff]
        %v1675 = vld [vmem:[#allocation8 + $0x88] sm:$0xff]
        %v1676 = vld [vmem:[#allocation8 + $0x90] sm:$0xff]
        %v1677 = vld [vmem:[#allocation8 + $0x98] sm:$0xff]
        %v1678 = vld [vmem:[#allocation8 + $0xa0] sm:$0xff]
        %v1679 = vld [vmem:[#allocation8 + $0xa8] sm:$0xff]
        %v1680 = vld [vmem:[#allocation8 + $0xb0] sm:$0xff]
        %v1681 = vld [vmem:[#allocation8 + $0xb8] sm:$0xff]
        %v1682 = vld [vmem:[#allocation8 + $0xc0] sm:$0xff]
        %v1683 = vld [vmem:[#allocation8 + $0xc8] sm:$0xff]
        %v1684 = vld [vmem:[#allocation8 + $0xd0] sm:$0xff]
        %v1685 = vld [vmem:[#allocation8 + $0xd8] sm:$0xff]
        %v1686 = vld [vmem:[#allocation8 + $0xe0] sm:$0xff]
        %v1687 = vld [vmem:[#allocation8 + $0xe8] sm:$0xff]
        %v1688 = vld [vmem:[#allocation8 + $0xf0] sm:$0xff]
        %v1689 = vld [vmem:[#allocation8 + $0xf8] sm:$0xff]
        %v1690 = vld [vmem:[%s4] sm:$0x1]
        %v1692 = vperm.slane %v1690, 0
        %vm1710 = vcmask 1041409
        %v1711 = vsel %vm1710, %v1566, %v1552
        %vm1712 = vcmask 1042434
        %v1713 = vsel %vm1712, %v1580, %v1711
        %vm1714 = vcmask 1043459
        %v1715 = vsel %vm1714, %v1594, %v1713
        %vm1716 = vcmask 1044484
        %v1717 = vsel %vm1716, %v1608, %v1715
        %vm1718 = vcmask 1045509
        %v1719 = vsel %vm1718, %v1622, %v1717
        %vm1720 = vcmask 1046534
        %v1721 = vsel %vm1720, %v1636, %v1719
        %vm1722 = vcmask 1047559
        %v1723 = vsel %vm1722, %v1650, %v1721
        %v1724 = vsel %vm1710, %v1573, %v1559
        %v1725 = vsel %vm1712, %v1587, %v1724
        %v1726 = vsel %vm1714, %v1601, %v1725
        %v1727 = vsel %vm1716, %v1615, %v1726
        %v1728 = vsel %vm1718, %v1629, %v1727
        %v1729 = vsel %vm1720, %v1643, %v1728
        %v1730 = vsel %vm1722, %v1657, %v1729
        %1733 = vmatpush.msra.mxu0 %v1673
        %1734 = vmatpush.msra.mxu0 %v1672
        %1735 = vmatpush.msra.mxu0 %v1671
        %1736 = vmatpush.msra.mxu0 %v1670
        %1737 = vmatpush.msra.mxu0 %v1669
        %1738 = vmatpush.msra.mxu0 %v1668
        %1739 = vmatpush.msra.mxu0 %v1667
        %1740 = vmatpush.msra.mxu0 %v1666
        %1741 = vmatpush.msra.mxu0 %v1665
        %1742 = vmatpush.msra.mxu0 %v1664
        %1743 = vmatpush.msra.mxu0 %v1663
        %1744 = vmatpush.msra.mxu0 %v1662
        %1745 = vmatpush.msra.mxu0 %v1661
        %1746 = vmatpush.msra.mxu0 %v1660
        %1747 = vmatpush.msra.mxu0 %v1659
        %1748 = vmatpush.msra.mxu0 %v1658
        %1749 = vmatmul.f32.gmra.mxu0 %v1723
        %v1750 = vpop.f32.mrf.mxu0
        %v1751 = vadd.f32 %v1692, %v1750
        %1752 = vdwg.mxu0
        %1753 = vmatpush.msra.mxu0 %v1689
        %1754 = vmatpush.msra.mxu0 %v1688
        %1755 = vmatpush.msra.mxu0 %v1687
        %1756 = vmatpush.msra.mxu0 %v1686
        %1757 = vmatpush.msra.mxu0 %v1685
        %1758 = vmatpush.msra.mxu0 %v1684
        %1759 = vmatpush.msra.mxu0 %v1683
        %1760 = vmatpush.msra.mxu0 %v1682
        %1761 = vmatpush.msra.mxu0 %v1681
        %1762 = vmatpush.msra.mxu0 %v1680
        %1763 = vmatpush.msra.mxu0 %v1679
        %1764 = vmatpush.msra.mxu0 %v1678
        %1765 = vmatpush.msra.mxu0 %v1677
        %1766 = vmatpush.msra.mxu0 %v1676
        %1767 = vmatpush.msra.mxu0 %v1675
        %1768 = vmatpush.msra.mxu0 %v1674
        %1769 = vmatmul.f32.gmra.mxu0 %v1730
        %v1770 = vpop.f32.mrf.mxu0
        %v1771 = vadd.f32 %v1751, %v1770
        %1772 = vdwg.mxu0
        %v1774 = vrot.slane %v1771, 1
        %v1775 = vrot.slane %v1771, 2
        %v1776 = vrot.slane %v1771, 3
        %v1777 = vrot.slane %v1771, 4
        %v1778 = vrot.slane %v1771, 5
        %v1779 = vrot.slane %v1771, 6
        %v1780 = vrot.slane %v1771, 7
        %1788 = vst [vmem:[%s295] sm:$0x1] %v1771
        %1789 = vst [vmem:[%s295 + $0x1] sm:$0x1] %v1774
        %1790 = vst [vmem:[%s295 + $0x2] sm:$0x1] %v1775
        %1791 = vst [vmem:[%s295 + $0x3] sm:$0x1] %v1776
        %1792 = vst [vmem:[%s295 + $0x4] sm:$0x1] %v1777
        %1793 = vst [vmem:[%s295 + $0x5] sm:$0x1] %v1778
        %1794 = vst [vmem:[%s295 + $0x6] sm:$0x1] %v1779
        %1795 = vst [vmem:[%s295 + $0x7] sm:$0x1] %v1780
        %s1796 = sand.u32 %s142, 1
        %s1797 = scalar_lea.sflag [#allocation4], %s1796
        %s1798 = sand.u32 %s142, 1
        %s1799 = smul.addr %s1798, 8
        %s1800 = scalar_lea.vmem [#allocation10], %s1799
        // Predicated region
        $region57: #{tpu_custom_call.1} parent=39 // pred_check
          %p1801 = pneg %p152
        $region58: #{tpu_custom_call.1} parent=39 // pred_check_branch
          %1803 = sbr.rel (%p1801) target = $region60
        $region59: #{tpu_custom_call.1} parent=39 // pred_region
          %s1804 = smul.u32 8, %s24
          %1806 = vsyncadd %s1797, 0
          %s1807 = scalar_lea.hbm %s5, %s1804
          %s1808 = sshll.u32 %s1800, 4
          %s1809 = int_to_ptr.vmem [resolvable:$true] %s1808
          %s1810 = sshll.u32 %s1807, 4
          %s1811 = int_to_ptr.hbm [resolvable:$true] %s1810
          %1816 = dma.vmem_to_hbm [thread:$0]  %s1809, 128, %s1811, %s1797, 16, 16, 1
        $region60: #{tpu_custom_call.1} parent=39 // pred_fallthru
          _
      $region40: #{tpu_custom_call.1} parent=5 // pred_fallthru
        _
      %p1817 = scmp.le.s32.totalorder 2, %s19
      // Predicated region
      $region61: #{tpu_custom_call.1} parent=5 // pred_check
        %p1818 = pneg %p1817
      $region62: #{tpu_custom_call.1} parent=5 // pred_check_branch
        %1820 = sbr.rel (%p1818) target = $region64
      $region63: #{tpu_custom_call.1} parent=5 // pred_region
        %s1821 = ssub.s32 %s19, 2
        // Predicated region
        $region65: #{tpu_custom_call.1} parent=63 // pred_check
          %p1822 = pneg %p158
        $region66: #{tpu_custom_call.1} parent=63 // pred_check_branch
          %1824 = sbr.rel (%p1822) target = $region68
        $region67: #{tpu_custom_call.1} parent=63 // pred_region
          %s1825 = sand.u32 %s143, 1
          %s1826 = scalar_lea.sflag [#allocation4], %s1825
          %s1827 = sand.u32 %s143, 1
          %s1828 = smul.addr %s1827, 8
          %s1829 = scalar_lea.vmem [#allocation10], %s1828
          %1831 = dma.done %s1826, 128
        $region68: #{tpu_custom_call.1} parent=63 // pred_fallthru
          _
      $region64: #{tpu_custom_call.1} parent=5 // pred_fallthru
        _
    $region6: #{tpu_custom_call.1} parent=1 // loop_footer
      %s23 = sadd.s32 1, %s19
    $region7: #{tpu_custom_call.1} parent=1 // loop_footer_branch
      %18 = sbr.rel target = $region3
    $region8: #{tpu_custom_call.1} parent=1 // loop_exit
      _
    %1832 = vsyncpa [#allocation3], 1
    %s1833 = scalar_lea.sflag [#allocation3], 1
    %1834 = vsyncpa %s1833, 1
    %1835 = vsyncpa [#allocation6], 1
    %1836 = vsyncpa [#allocation9], 1
    %1837 = vsyncpa [#allocation4], 1
    %s1838 = scalar_lea.sflag [#allocation4], 1
    %1839 = vsyncpa %s1838, 1

</llo_original>
